<compile_context>
chip_gen: v7x
topology: tpu7x:2x2x1
jax: 0.10.0
libtpu: 0.0.40
codegen_flags: <defaults>
</compile_context>

<pallas_src>
import functools

import jax
import jax.numpy as jnp
from jax.experimental import pallas as pl
from jax.experimental.pallas import tpu as pltpu

_KS = 3  # depthwise kernel size (padding = _KS // 2)


def _erf(x):
    # Abramowitz & Stegun 7.1.26 polynomial (|err| <= 1.5e-7 in exact arithmetic).
    # The divide is an approximate EUP reciprocal; this loosens the bound to
    # ~1e-4 relative, still far below the test tolerance.
    a1, a2, a3, a4, a5 = 0.254829592, -0.284496736, 1.421413741, -1.453152027, 1.061405429
    p = 0.3275911
    ax = jnp.abs(x)
    t = pl.reciprocal(1.0 + p * ax, approx=True)
    poly = ((((a5 * t + a4) * t + a3) * t + a2) * t + a1) * t
    y = 1.0 - poly * jnp.exp(-ax * ax)
    return jnp.where(x >= 0, y, -y)


def _gelu(x):
    # exact (erf-based) GELU, matching torch.nn.GELU() default
    return 0.5 * x * (1.0 + _erf(x * 0.7071067811865476))


def _ffn_kernel(x_ref, w1_ref, b1_ref, wdw_ref, bdw_ref, wd_ref, bd_ref,
                sig_ref, w2_ref, b2_ref, out_ref, *, width, tile_rows):
    W = width
    th = tile_rows
    hid = w1_ref.shape[0]
    swin = x_ref.shape[-1]          # (th + 2) * W : tile rows + 1-row halo above/below
    ts = th * W                     # output lanes produced by this tile

    j = pl.program_id(1)
    nj = pl.num_programs(1)

    # ---- fc1 (1x1 conv): channels contract on the MXU, spatial stays in lanes ----
    h = jnp.dot(w1_ref[...], x_ref[...],
                preferred_element_type=jnp.float32) + b1_ref[...]      # (hid, swin) f32

    # Halo rows outside the image must be *zero* hidden activations (the depthwise
    # conv zero-pads its input); fc1 of a zero-padded x row gives the bias, so mask.
    lane = jax.lax.broadcasted_iota(jnp.int32, (1, swin), 1)
    top_ok = jnp.logical_or(lane >= W, j > 0)
    bot_ok = jnp.logical_or(lane < swin - W, j < nj - 1)
    h = jnp.where(jnp.logical_and(top_ok, bot_ok), h, 0.0)

    # ---- depthwise 3x3 conv: 9 static lane-shifted slices + W-edge masks ----
    # No concatenate-padded copies of the hidden tensor: one zero column on each
    # side gives the corner taps their +-1 lane of slack.
    zcol = jnp.zeros((hid, 1), jnp.float32)
    hp = jnp.concatenate([zcol, h, zcol], axis=1)                      # (hid, swin + 2)

    xcol = jax.lax.broadcasted_iota(jnp.int32, (1, ts), 1) % W
    not_left = xcol != 0            # kills the wrapped column for left-neighbour taps
    not_right = xcol != W - 1       # kills the wrapped column for right-neighbour taps

    wdw = wdw_ref[...]                                                 # (hid, 9) f32
    acc = jnp.broadcast_to(bdw_ref[...], (hid, ts))                    # dwconv bias
    for dy in range(_KS):
        for dx in range(_KS):
            tap = hp[:, dy * W + dx: dy * W + dx + ts]                 # (hid, ts)
            if dx == 0:
                tap = jnp.where(not_left, tap, 0.0)
            elif dx == 2:
                tap = jnp.where(not_right, tap, 0.0)
            acc = acc + tap * wdw[:, dy * _KS + dx: dy * _KS + dx + 1]

    # ---- activation (exact GELU), lane dense ----
    h2 = _gelu(acc)                                                    # (hid, ts) f32

    # ---- feat_decompose: h2 + sigma * (h2 - gelu(decompose(h2))) ----
    # decompose (1x1 conv hid -> 1) rides the otherwise-idle MXU.  Its weight is
    # replicated to 8 identical rows in the wrapper so the LHS is a full
    # 8-sublane MXU operand; row 0 of the product is the per-pixel channel sum.
    h2b = h2.astype(jnp.bfloat16)
    d8 = jnp.dot(wd_ref[...], h2b, preferred_element_type=jnp.float32)  # (8, ts)
    d = d8[0:1, :] + bd_ref[...]                                        # (1, ts)
    gd = _gelu(d)                                                       # lane dense
    h3 = h2 + sig_ref[...] * (h2 - gd)

    # ---- fc2 (1x1 conv hid -> embed), lane-dense output block ----
    y = jnp.dot(w2_ref[...], h3.astype(jnp.bfloat16),
                preferred_element_type=jnp.float32) + b2_ref[...]       # (cout, ts)
    out_ref[...] = y.astype(out_ref.dtype)


def channel_aggregation_ffn(x, params, *, tile_rows=8):
    """x: (N, embed_dims, H, W) NCHW float32.  Returns (N, embed_dims, H, W)."""
    n, cin, H, W = x.shape
    hid, cin_w = params["w1"].shape
    cout = params["w2"].shape[0]
    assert cin_w == cin
    assert H % tile_rows == 0, "pick tile_rows that divides H"
    th = tile_rows
    nj = H // th
    swin = (th + 2) * W
    ts = th * W

    # ---- wrapper-side halo exchange on the (small) input tensor ----
    # Zero-pad H by 1 row each side, then materialise each tile's (th+2)-row
    # window flattened onto lanes: (N, nj, cin, (th+2)*W), bf16 for half the DMA.
    xp = jnp.pad(x, ((0, 0), (0, 0), (1, 1), (0, 0)))
    x_halo = jnp.stack(
        [xp[:, :, j * th: j * th + th + 2, :] for j in range(nj)], axis=1
    ).reshape(n, nj, cin, swin).astype(jnp.bfloat16)

    # ---- parameters in kernel layout (channels on sublanes) ----
    w1t = params["w1"].astype(jnp.bfloat16)                              # (hid, cin)
    b1c = params["b1"].reshape(hid, 1).astype(jnp.float32)
    wdwc = params["wdw"].astype(jnp.float32)                             # (hid, 9)
    bdwc = params["bdw"].reshape(hid, 1).astype(jnp.float32)
    wd8 = jnp.tile(params["wd"].reshape(1, hid), (8, 1)).astype(jnp.bfloat16)  # (8, hid)
    bdc = params["bd"].reshape(1, 1).astype(jnp.float32)
    sigc = params["sigma"].reshape(hid, 1).astype(jnp.float32)
    w2t = params["w2"].astype(jnp.bfloat16)                              # (cout, hid)
    b2c = params["b2"].reshape(cout, 1).astype(jnp.float32)

    def rep(shape):
        return pl.BlockSpec(shape, lambda i, j: (0,) * len(shape))

    pix = n * H * W
    cost = pl.CostEstimate(
        flops=int(pix * (2 * cin * hid + (2 * 9 + 25) * hid + 2 * 8 * hid + 2 * hid * cout)),
        transcendentals=int(pix * (2 * hid + 2)),   # exp + approx reciprocal per GELU elem
        bytes_accessed=int(x_halo.size * 2 + pix * cout * 4 +
                           sum(int(p.size) * 4 for p in params.values())),
    )

    out_flat = pl.pallas_call(
        functools.partial(_ffn_kernel, width=W, tile_rows=th),
        out_shape=jax.ShapeDtypeStruct((n, cout, H * W), x.dtype),
        grid=(n, nj),
        in_specs=[
            pl.BlockSpec((None, None, cin, swin), lambda i, j: (i, j, 0, 0)),
            rep((hid, cin)),    # fc1 weight (bf16)
            rep((hid, 1)),      # fc1 bias
            rep((hid, 9)),      # dwconv weight
            rep((hid, 1)),      # dwconv bias
            rep((8, hid)),      # decompose weight (row-replicated, bf16)
            rep((1, 1)),        # decompose bias
            rep((hid, 1)),      # sigma
            rep((cout, hid)),   # fc2 weight (bf16)
            rep((cout, 1)),     # fc2 bias
        ],
        out_specs=pl.BlockSpec((None, cout, ts), lambda i, j: (i, 0, j)),
        compiler_params=pltpu.CompilerParams(
            dimension_semantics=("parallel", "parallel"),
            # Per-step working set is a few (hid, (th+2)*W) f32 tiles plus the
            # double-buffered I/O blocks — far under every generation's budget at
            # demo scale.  For real MogaNet shapes pick tile_rows so this stays
            # <= ~24 MiB on v5e/v6e and <= ~12 MiB on v7x (64 MiB physical VMEM).
            vmem_limit_bytes=32 * 1024 * 1024,
        ),
        cost_estimate=cost,
    )(x_halo, w1t, b1c, wdwc, bdwc, wd8, bdc, sigc, w2t, b2c)

    return out_flat.reshape(n, cout, H, W)


if __name__ == "__main__":
    N, H, W = 2, 16, 16
    embed_dims, mlp_hidden_dims = 8, 32

    key = jax.random.PRNGKey(0)
    ks = jax.random.split(key, 10)
    params = {
        "w1":    0.2 * jax.random.normal(ks[0], (mlp_hidden_dims, embed_dims), jnp.float32),
        "b1":    0.1 * jax.random.normal(ks[1], (mlp_hidden_dims,), jnp.float32),
        "wdw":   0.2 * jax.random.normal(ks[2], (mlp_hidden_dims, _KS * _KS), jnp.float32),
        "bdw":   0.1 * jax.random.normal(ks[3], (mlp_hidden_dims,), jnp.float32),
        "wd":    0.2 * jax.random.normal(ks[4], (1, mlp_hidden_dims), jnp.float32),
        "bd":    0.1 * jax.random.normal(ks[5], (1,), jnp.float32),
        "sigma": 1e-5 * jnp.ones((mlp_hidden_dims,), jnp.float32),
        "w2":    0.2 * jax.random.normal(ks[6], (embed_dims, mlp_hidden_dims), jnp.float32),
        "b2":    0.1 * jax.random.normal(ks[7], (embed_dims,), jnp.float32),
    }
    x = jax.random.normal(ks[8], (N, embed_dims, H, W), jnp.float32)   # NCHW, like PyTorch

    out = jax.block_until_ready(channel_aggregation_ffn(x, params))

    # Pure-JAX f32 reference (exact erf GELU), NCHW.
    def ref(x, p):
        h = jnp.einsum("oc,nchw->nohw", p["w1"], x) + p["b1"][None, :, None, None]
        hp = jnp.pad(h, ((0, 0), (0, 0), (1, 1), (1, 1)))
        acc = jnp.zeros_like(h) + p["bdw"][None, :, None, None]
        for dy in range(_KS):
            for dx in range(_KS):
                acc = acc + hp[:, :, dy:dy + H, dx:dx + W] * \
                    p["wdw"][:, dy * _KS + dx][None, :, None, None]
        h2 = jax.nn.gelu(acc, approximate=False)
        d = jnp.einsum("oc,nchw->nohw", p["wd"], h2) + p["bd"].reshape(1, 1, 1, 1)
        h3 = h2 + p["sigma"][None, :, None, None] * (h2 - jax.nn.gelu(d, approximate=False))
        return jnp.einsum("oc,nchw->nohw", p["w2"], h3) + p["b2"][None, :, None, None]

    expected = ref(x, params)
    err = jnp.max(jnp.abs(out - expected))
    # bf16 matmul operands + approx EUP reciprocal inside erf => looser tolerance
    # than a pure-f32 kernel would need.
    assert err < 5e-2, f"Pallas output mismatch vs reference: max abs err {err}"
    print("KERNEL_OK")
</pallas_src>

<mosaic_0001>
module attributes {stable_mosaic.version = 11 : i64} {
  func.func @_ffn_kernel(%arg0: i32, %arg1: i32, %arg2: memref<1x1x8x160xbf16, #tpu.memory_space<vmem>>, %arg3: memref<32x8xbf16, #tpu.memory_space<vmem>>, %arg4: memref<32x1xf32, #tpu.memory_space<vmem>>, %arg5: memref<32x9xf32, #tpu.memory_space<vmem>>, %arg6: memref<32x1xf32, #tpu.memory_space<vmem>>, %arg7: memref<8x32xbf16, #tpu.memory_space<vmem>>, %arg8: memref<1x1xf32, #tpu.memory_space<vmem>>, %arg9: memref<32x1xf32, #tpu.memory_space<vmem>>, %arg10: memref<8x32xbf16, #tpu.memory_space<vmem>>, %arg11: memref<8x1xf32, #tpu.memory_space<vmem>>, %arg12: memref<1x8x128xf32, #tpu.memory_space<vmem>>) attributes {dimension_semantics = [#tpu.dimension_semantics<parallel>, #tpu.dimension_semantics<parallel>], iteration_bounds = array<i64: 2, 2>, scalar_prefetch = 0 : i64, scratch_operands = 0 : i64, tpu.core_type = #tpu.core_type<tc>, window_params = [{transform_indices = @transform_0, window_bounds = array<i64: 1, 1, 8, 160>}, {pipeline_mode = #tpu.pipeline_mode<synchronous>, transform_indices = @transform_1, window_bounds = array<i64: 32, 8>}, {pipeline_mode = #tpu.pipeline_mode<synchronous>, transform_indices = @transform_2, window_bounds = array<i64: 32, 1>}, {pipeline_mode = #tpu.pipeline_mode<synchronous>, transform_indices = @transform_3, window_bounds = array<i64: 32, 9>}, {pipeline_mode = #tpu.pipeline_mode<synchronous>, transform_indices = @transform_4, window_bounds = array<i64: 32, 1>}, {pipeline_mode = #tpu.pipeline_mode<synchronous>, transform_indices = @transform_5, window_bounds = array<i64: 8, 32>}, {pipeline_mode = #tpu.pipeline_mode<synchronous>, transform_indices = @transform_6, window_bounds = array<i64: 1, 1>}, {pipeline_mode = #tpu.pipeline_mode<synchronous>, transform_indices = @transform_7, window_bounds = array<i64: 32, 1>}, {pipeline_mode = #tpu.pipeline_mode<synchronous>, transform_indices = @transform_8, window_bounds = array<i64: 8, 32>}, {pipeline_mode = #tpu.pipeline_mode<synchronous>, transform_indices = @transform_9, window_bounds = array<i64: 8, 1>}, {transform_indices = @transform_10, window_bounds = array<i64: 1, 8, 128>}]} {
    %c0 = arith.constant 0 : index
    %c0_0 = arith.constant 0 : index
    %0 = vector.load %arg3[%c0, %c0_0] : memref<32x8xbf16, #tpu.memory_space<vmem>>, vector<32x8xbf16>
    %c0_1 = arith.constant 0 : index
    %c0_2 = arith.constant 0 : index
    %c0_3 = arith.constant 0 : index
    %c0_4 = arith.constant 0 : index
    %1 = vector.load %arg2[%c0_1, %c0_2, %c0_3, %c0_4] : memref<1x1x8x160xbf16, #tpu.memory_space<vmem>>, vector<1x1x8x160xbf16>
    %2 = vector.shape_cast %1 : vector<1x1x8x160xbf16> to vector<8x160xbf16>
    %cst = arith.constant dense<0.000000e+00> : vector<32x160xf32>
    %3 = tpu.matmul %0, %2, %cst {dimension_numbers = #tpu.dot_dimension_numbers<[1], [0], [0], [1], [0, 0, 1, 1], [], []>} : vector<32x8xbf16>, vector<8x160xbf16>, vector<32x160xf32> -> vector<32x160xf32>
    %c0_5 = arith.constant 0 : index
    %c0_6 = arith.constant 0 : index
    %4 = vector.load %arg4[%c0_5, %c0_6] : memref<32x1xf32, #tpu.memory_space<vmem>>, vector<32x1xf32>
    %5 = vector.broadcast %4 : vector<32x1xf32> to vector<32x160xf32>
    %6 = arith.addf %3, %5 : vector<32x160xf32>
    %7 = tpu.iota {dimensions = array<i32: 1>} : vector<1x160xi32>
    %c16_i32 = arith.constant 16 : i32
    %8 = vector.broadcast %c16_i32 : i32 to vector<1x160xi32>
    %9 = arith.cmpi sge, %7, %8 : vector<1x160xi32>
    %c0_i32 = arith.constant 0 : i32
    %10 = arith.cmpi sgt, %arg1, %c0_i32 : i32
    %11 = vector.broadcast %10 : i1 to vector<1x160xi1>
    %12 = arith.ori %9, %11 : vector<1x160xi1>
    %c144_i32 = arith.constant 144 : i32
    %13 = vector.broadcast %c144_i32 : i32 to vector<1x160xi32>
    %14 = arith.cmpi slt, %7, %13 : vector<1x160xi32>
    %c1_i32 = arith.constant 1 : i32
    %15 = arith.cmpi slt, %arg1, %c1_i32 : i32
    %16 = vector.broadcast %15 : i1 to vector<1x160xi1>
    %17 = arith.ori %14, %16 : vector<1x160xi1>
    %18 = arith.andi %12, %17 : vector<1x160xi1>
    %cst_7 = arith.constant 0.000000e+00 : f32
    %19 = vector.shape_cast %18 : vector<1x160xi1> to vector<1x160xi1>
    %20 = vector.broadcast %19 : vector<1x160xi1> to vector<32x160xi1>
    %21 = vector.broadcast %cst_7 : f32 to vector<32x160xf32>
    %22 = arith.select %20, %6, %21 : vector<32x160xi1>, vector<32x160xf32>
    %cst_8 = arith.constant 0.000000e+00 : f32
    %23 = vector.broadcast %cst_8 : f32 to vector<32x1xf32>
    %24 = tpu.concatenate %23, %22, %23 in 1 : vector<32x1xf32>, vector<32x160xf32>, vector<32x1xf32> -> vector<32x162xf32>
    %25 = tpu.iota {dimensions = array<i32: 1>} : vector<1x128xi32>
    %c16_i32_9 = arith.constant 16 : i32
    %c0_i32_10 = arith.constant 0 : i32
    %26 = arith.cmpi eq, %c16_i32_9, %c0_i32_10 : i32
    %c1_i32_11 = arith.constant 1 : i32
    %27 = arith.select %26, %c1_i32_11, %c16_i32_9 : i32
    %28 = vector.broadcast %27 : i32 to vector<1x128xi32>
    %29 = arith.remsi %25, %28 : vector<1x128xi32>
    %c0_i32_12 = arith.constant 0 : i32
    %30 = vector.broadcast %c0_i32_12 : i32 to vector<1x128xi32>
    %31 = arith.cmpi ne, %29, %30 : vector<1x128xi32>
    %c0_i32_13 = arith.constant 0 : i32
    %32 = vector.broadcast %c0_i32_13 : i32 to vector<1x128xi32>
    %33 = arith.cmpi slt, %29, %32 : vector<1x128xi32>
    %c0_i32_14 = arith.constant 0 : i32
    %34 = arith.cmpi slt, %27, %c0_i32_14 : i32
    %35 = vector.broadcast %34 : i1 to vector<1x128xi1>
    %36 = vector.broadcast %35 : vector<1x128xi1> to vector<1x128xi1>
    %37 = arith.xori %33, %36 : vector<1x128xi1>
    %38 = arith.andi %37, %31 : vector<1x128xi1>
    %39 = vector.broadcast %27 : i32 to vector<1x128xi32>
    %40 = arith.addi %29, %39 : vector<1x128xi32>
    %41 = arith.select %38, %40, %29 : vector<1x128xi1>, vector<1x128xi32>
    %c0_i32_15 = arith.constant 0 : i32
    %42 = vector.broadcast %c0_i32_15 : i32 to vector<1x128xi32>
    %43 = arith.cmpi ne, %41, %42 : vector<1x128xi32>
    %c15_i32 = arith.constant 15 : i32
    %44 = vector.broadcast %c15_i32 : i32 to vector<1x128xi32>
    %45 = arith.cmpi ne, %41, %44 : vector<1x128xi32>
    %c0_16 = arith.constant 0 : index
    %c0_17 = arith.constant 0 : index
    %46 = vector.load %arg5[%c0_16, %c0_17] : memref<32x9xf32, #tpu.memory_space<vmem>>, vector<32x9xf32>
    %c0_18 = arith.constant 0 : index
    %c0_19 = arith.constant 0 : index
    %47 = vector.load %arg6[%c0_18, %c0_19] : memref<32x1xf32, #tpu.memory_space<vmem>>, vector<32x1xf32>
    %48 = vector.shape_cast %47 : vector<32x1xf32> to vector<32x1xf32>
    %49 = vector.broadcast %48 : vector<32x1xf32> to vector<32x128xf32>
    %50 = vector.extract_strided_slice %24 {offsets = [0, 0], sizes = [32, 128], strides = [1, 1]} : vector<32x162xf32> to vector<32x128xf32>
    %cst_20 = arith.constant 0.000000e+00 : f32
    %51 = vector.shape_cast %43 : vector<1x128xi1> to vector<1x128xi1>
    %52 = vector.broadcast %51 : vector<1x128xi1> to vector<32x128xi1>
    %53 = vector.broadcast %cst_20 : f32 to vector<32x128xf32>
    %54 = arith.select %52, %50, %53 : vector<32x128xi1>, vector<32x128xf32>
    %55 = vector.extract_strided_slice %46 {offsets = [0, 0], sizes = [32, 1], strides = [1, 1]} : vector<32x9xf32> to vector<32x1xf32>
    %56 = vector.broadcast %55 : vector<32x1xf32> to vector<32x128xf32>
    %57 = arith.mulf %54, %56 : vector<32x128xf32>
    %58 = arith.addf %49, %57 : vector<32x128xf32>
    %59 = vector.extract_strided_slice %24 {offsets = [0, 1], sizes = [32, 128], strides = [1, 1]} : vector<32x162xf32> to vector<32x128xf32>
    %60 = vector.extract_strided_slice %46 {offsets = [0, 1], sizes = [32, 1], strides = [1, 1]} : vector<32x9xf32> to vector<32x1xf32>
    %61 = vector.broadcast %60 : vector<32x1xf32> to vector<32x128xf32>
    %62 = arith.mulf %59, %61 : vector<32x128xf32>
    %63 = arith.addf %58, %62 : vector<32x128xf32>
    %64 = vector.extract_strided_slice %24 {offsets = [0, 2], sizes = [32, 128], strides = [1, 1]} : vector<32x162xf32> to vector<32x128xf32>
    %cst_21 = arith.constant 0.000000e+00 : f32
    %65 = vector.shape_cast %45 : vector<1x128xi1> to vector<1x128xi1>
    %66 = vector.broadcast %65 : vector<1x128xi1> to vector<32x128xi1>
    %67 = vector.broadcast %cst_21 : f32 to vector<32x128xf32>
    %68 = arith.select %66, %64, %67 : vector<32x128xi1>, vector<32x128xf32>
    %69 = vector.extract_strided_slice %46 {offsets = [0, 2], sizes = [32, 1], strides = [1, 1]} : vector<32x9xf32> to vector<32x1xf32>
    %70 = vector.broadcast %69 : vector<32x1xf32> to vector<32x128xf32>
    %71 = arith.mulf %68, %70 : vector<32x128xf32>
    %72 = arith.addf %63, %71 : vector<32x128xf32>
    %73 = vector.extract_strided_slice %24 {offsets = [0, 16], sizes = [32, 128], strides = [1, 1]} : vector<32x162xf32> to vector<32x128xf32>
    %cst_22 = arith.constant 0.000000e+00 : f32
    %74 = vector.shape_cast %43 : vector<1x128xi1> to vector<1x128xi1>
    %75 = vector.broadcast %74 : vector<1x128xi1> to vector<32x128xi1>
    %76 = vector.broadcast %cst_22 : f32 to vector<32x128xf32>
    %77 = arith.select %75, %73, %76 : vector<32x128xi1>, vector<32x128xf32>
    %78 = vector.extract_strided_slice %46 {offsets = [0, 3], sizes = [32, 1], strides = [1, 1]} : vector<32x9xf32> to vector<32x1xf32>
    %79 = vector.broadcast %78 : vector<32x1xf32> to vector<32x128xf32>
    %80 = arith.mulf %77, %79 : vector<32x128xf32>
    %81 = arith.addf %72, %80 : vector<32x128xf32>
    %82 = vector.extract_strided_slice %24 {offsets = [0, 17], sizes = [32, 128], strides = [1, 1]} : vector<32x162xf32> to vector<32x128xf32>
    %83 = vector.extract_strided_slice %46 {offsets = [0, 4], sizes = [32, 1], strides = [1, 1]} : vector<32x9xf32> to vector<32x1xf32>
    %84 = vector.broadcast %83 : vector<32x1xf32> to vector<32x128xf32>
    %85 = arith.mulf %82, %84 : vector<32x128xf32>
    %86 = arith.addf %81, %85 : vector<32x128xf32>
    %87 = vector.extract_strided_slice %24 {offsets = [0, 18], sizes = [32, 128], strides = [1, 1]} : vector<32x162xf32> to vector<32x128xf32>
    %cst_23 = arith.constant 0.000000e+00 : f32
    %88 = vector.shape_cast %45 : vector<1x128xi1> to vector<1x128xi1>
    %89 = vector.broadcast %88 : vector<1x128xi1> to vector<32x128xi1>
    %90 = vector.broadcast %cst_23 : f32 to vector<32x128xf32>
    %91 = arith.select %89, %87, %90 : vector<32x128xi1>, vector<32x128xf32>
    %92 = vector.extract_strided_slice %46 {offsets = [0, 5], sizes = [32, 1], strides = [1, 1]} : vector<32x9xf32> to vector<32x1xf32>
    %93 = vector.broadcast %92 : vector<32x1xf32> to vector<32x128xf32>
    %94 = arith.mulf %91, %93 : vector<32x128xf32>
    %95 = arith.addf %86, %94 : vector<32x128xf32>
    %96 = vector.extract_strided_slice %24 {offsets = [0, 32], sizes = [32, 128], strides = [1, 1]} : vector<32x162xf32> to vector<32x128xf32>
    %cst_24 = arith.constant 0.000000e+00 : f32
    %97 = vector.shape_cast %43 : vector<1x128xi1> to vector<1x128xi1>
    %98 = vector.broadcast %97 : vector<1x128xi1> to vector<32x128xi1>
    %99 = vector.broadcast %cst_24 : f32 to vector<32x128xf32>
    %100 = arith.select %98, %96, %99 : vector<32x128xi1>, vector<32x128xf32>
    %101 = vector.extract_strided_slice %46 {offsets = [0, 6], sizes = [32, 1], strides = [1, 1]} : vector<32x9xf32> to vector<32x1xf32>
    %102 = vector.broadcast %101 : vector<32x1xf32> to vector<32x128xf32>
    %103 = arith.mulf %100, %102 : vector<32x128xf32>
    %104 = arith.addf %95, %103 : vector<32x128xf32>
    %105 = vector.extract_strided_slice %24 {offsets = [0, 33], sizes = [32, 128], strides = [1, 1]} : vector<32x162xf32> to vector<32x128xf32>
    %106 = vector.extract_strided_slice %46 {offsets = [0, 7], sizes = [32, 1], strides = [1, 1]} : vector<32x9xf32> to vector<32x1xf32>
    %107 = vector.broadcast %106 : vector<32x1xf32> to vector<32x128xf32>
    %108 = arith.mulf %105, %107 : vector<32x128xf32>
    %109 = arith.addf %104, %108 : vector<32x128xf32>
    %110 = vector.extract_strided_slice %24 {offsets = [0, 34], sizes = [32, 128], strides = [1, 1]} : vector<32x162xf32> to vector<32x128xf32>
    %cst_25 = arith.constant 0.000000e+00 : f32
    %111 = vector.shape_cast %45 : vector<1x128xi1> to vector<1x128xi1>
    %112 = vector.broadcast %111 : vector<1x128xi1> to vector<32x128xi1>
    %113 = vector.broadcast %cst_25 : f32 to vector<32x128xf32>
    %114 = arith.select %112, %110, %113 : vector<32x128xi1>, vector<32x128xf32>
    %115 = vector.extract_strided_slice %46 {offsets = [0, 8], sizes = [32, 1], strides = [1, 1]} : vector<32x9xf32> to vector<32x1xf32>
    %116 = vector.broadcast %115 : vector<32x1xf32> to vector<32x128xf32>
    %117 = arith.mulf %114, %116 : vector<32x128xf32>
    %118 = arith.addf %109, %117 : vector<32x128xf32>
    %cst_26 = arith.constant 5.000000e-01 : f32
    %119 = vector.broadcast %cst_26 : f32 to vector<32x128xf32>
    %120 = arith.mulf %119, %118 : vector<32x128xf32>
    %cst_27 = arith.constant 0.707106769 : f32
    %121 = vector.broadcast %cst_27 : f32 to vector<32x128xf32>
    %122 = arith.mulf %118, %121 : vector<32x128xf32>
    %123 = math.absf %122 : vector<32x128xf32>
    %cst_28 = arith.constant 0.327591091 : f32
    %124 = vector.broadcast %cst_28 : f32 to vector<32x128xf32>
    %125 = arith.mulf %124, %123 : vector<32x128xf32>
    %cst_29 = arith.constant 1.000000e+00 : f32
    %126 = vector.broadcast %cst_29 : f32 to vector<32x128xf32>
    %127 = arith.addf %126, %125 : vector<32x128xf32>
    %128 = tpu.reciprocal %127 {approx = true} : vector<32x128xf32> -> vector<32x128xf32>
    %cst_30 = arith.constant 1.06140542 : f32
    %129 = vector.broadcast %cst_30 : f32 to vector<32x128xf32>
    %130 = arith.mulf %129, %128 : vector<32x128xf32>
    %cst_31 = arith.constant -1.45315206 : f32
    %131 = vector.broadcast %cst_31 : f32 to vector<32x128xf32>
    %132 = arith.addf %130, %131 : vector<32x128xf32>
    %133 = arith.mulf %132, %128 : vector<32x128xf32>
    %cst_32 = arith.constant 1.42141378 : f32
    %134 = vector.broadcast %cst_32 : f32 to vector<32x128xf32>
    %135 = arith.addf %133, %134 : vector<32x128xf32>
    %136 = arith.mulf %135, %128 : vector<32x128xf32>
    %cst_33 = arith.constant -0.284496725 : f32
    %137 = vector.broadcast %cst_33 : f32 to vector<32x128xf32>
    %138 = arith.addf %136, %137 : vector<32x128xf32>
    %139 = arith.mulf %138, %128 : vector<32x128xf32>
    %cst_34 = arith.constant 0.254829586 : f32
    %140 = vector.broadcast %cst_34 : f32 to vector<32x128xf32>
    %141 = arith.addf %139, %140 : vector<32x128xf32>
    %142 = arith.mulf %141, %128 : vector<32x128xf32>
    %cst_35 = arith.constant 0.000000e+00 : f32
    %143 = vector.broadcast %cst_35 : f32 to vector<32x128xf32>
    %144 = arith.subf %143, %123 : vector<32x128xf32>
    %145 = arith.mulf %144, %123 : vector<32x128xf32>
    %146 = math.exp %145 : vector<32x128xf32>
    %147 = arith.mulf %142, %146 : vector<32x128xf32>
    %cst_36 = arith.constant 1.000000e+00 : f32
    %148 = vector.broadcast %cst_36 : f32 to vector<32x128xf32>
    %149 = arith.subf %148, %147 : vector<32x128xf32>
    %cst_37 = arith.constant 0.000000e+00 : f32
    %150 = vector.broadcast %cst_37 : f32 to vector<32x128xf32>
    %151 = arith.cmpf oge, %122, %150 : vector<32x128xf32>
    %cst_38 = arith.constant 0.000000e+00 : f32
    %152 = vector.broadcast %cst_38 : f32 to vector<32x128xf32>
    %153 = arith.subf %152, %149 : vector<32x128xf32>
    %154 = arith.select %151, %149, %153 : vector<32x128xi1>, vector<32x128xf32>
    %cst_39 = arith.constant 1.000000e+00 : f32
    %155 = vector.broadcast %cst_39 : f32 to vector<32x128xf32>
    %156 = arith.addf %155, %154 : vector<32x128xf32>
    %157 = arith.mulf %120, %156 : vector<32x128xf32>
    %158 = arith.truncf %157 : vector<32x128xf32> to vector<32x128xbf16>
    %c0_40 = arith.constant 0 : index
    %c0_41 = arith.constant 0 : index
    %159 = vector.load %arg7[%c0_40, %c0_41] : memref<8x32xbf16, #tpu.memory_space<vmem>>, vector<8x32xbf16>
    %cst_42 = arith.constant dense<0.000000e+00> : vector<8x128xf32>
    %160 = tpu.matmul %159, %158, %cst_42 {dimension_numbers = #tpu.dot_dimension_numbers<[1], [0], [0], [1], [0, 0, 1, 1], [], []>} : vector<8x32xbf16>, vector<32x128xbf16>, vector<8x128xf32> -> vector<8x128xf32>
    %161 = vector.extract_strided_slice %160 {offsets = [0, 0], sizes = [1, 128], strides = [1, 1]} : vector<8x128xf32> to vector<1x128xf32>
    %c0_43 = arith.constant 0 : index
    %c0_44 = arith.constant 0 : index
    %162 = vector.load %arg8[%c0_43, %c0_44] : memref<1x1xf32, #tpu.memory_space<vmem>>, vector<1x1xf32>
    %163 = vector.broadcast %162 : vector<1x1xf32> to vector<1x128xf32>
    %164 = arith.addf %161, %163 : vector<1x128xf32>
    %cst_45 = arith.constant 5.000000e-01 : f32
    %165 = vector.broadcast %cst_45 : f32 to vector<1x128xf32>
    %166 = arith.mulf %165, %164 : vector<1x128xf32>
    %cst_46 = arith.constant 0.707106769 : f32
    %167 = vector.broadcast %cst_46 : f32 to vector<1x128xf32>
    %168 = arith.mulf %164, %167 : vector<1x128xf32>
    %169 = math.absf %168 : vector<1x128xf32>
    %cst_47 = arith.constant 0.327591091 : f32
    %170 = vector.broadcast %cst_47 : f32 to vector<1x128xf32>
    %171 = arith.mulf %170, %169 : vector<1x128xf32>
    %cst_48 = arith.constant 1.000000e+00 : f32
    %172 = vector.broadcast %cst_48 : f32 to vector<1x128xf32>
    %173 = arith.addf %172, %171 : vector<1x128xf32>
    %174 = tpu.reciprocal %173 {approx = true} : vector<1x128xf32> -> vector<1x128xf32>
    %cst_49 = arith.constant 1.06140542 : f32
    %175 = vector.broadcast %cst_49 : f32 to vector<1x128xf32>
    %176 = arith.mulf %175, %174 : vector<1x128xf32>
    %cst_50 = arith.constant -1.45315206 : f32
    %177 = vector.broadcast %cst_50 : f32 to vector<1x128xf32>
    %178 = arith.addf %176, %177 : vector<1x128xf32>
    %179 = arith.mulf %178, %174 : vector<1x128xf32>
    %cst_51 = arith.constant 1.42141378 : f32
    %180 = vector.broadcast %cst_51 : f32 to vector<1x128xf32>
    %181 = arith.addf %179, %180 : vector<1x128xf32>
    %182 = arith.mulf %181, %174 : vector<1x128xf32>
    %cst_52 = arith.constant -0.284496725 : f32
    %183 = vector.broadcast %cst_52 : f32 to vector<1x128xf32>
    %184 = arith.addf %182, %183 : vector<1x128xf32>
    %185 = arith.mulf %184, %174 : vector<1x128xf32>
    %cst_53 = arith.constant 0.254829586 : f32
    %186 = vector.broadcast %cst_53 : f32 to vector<1x128xf32>
    %187 = arith.addf %185, %186 : vector<1x128xf32>
    %188 = arith.mulf %187, %174 : vector<1x128xf32>
    %cst_54 = arith.constant 0.000000e+00 : f32
    %189 = vector.broadcast %cst_54 : f32 to vector<1x128xf32>
    %190 = arith.subf %189, %169 : vector<1x128xf32>
    %191 = arith.mulf %190, %169 : vector<1x128xf32>
    %192 = math.exp %191 : vector<1x128xf32>
    %193 = arith.mulf %188, %192 : vector<1x128xf32>
    %cst_55 = arith.constant 1.000000e+00 : f32
    %194 = vector.broadcast %cst_55 : f32 to vector<1x128xf32>
    %195 = arith.subf %194, %193 : vector<1x128xf32>
    %cst_56 = arith.constant 0.000000e+00 : f32
    %196 = vector.broadcast %cst_56 : f32 to vector<1x128xf32>
    %197 = arith.cmpf oge, %168, %196 : vector<1x128xf32>
    %cst_57 = arith.constant 0.000000e+00 : f32
    %198 = vector.broadcast %cst_57 : f32 to vector<1x128xf32>
    %199 = arith.subf %198, %195 : vector<1x128xf32>
    %200 = arith.select %197, %195, %199 : vector<1x128xi1>, vector<1x128xf32>
    %cst_58 = arith.constant 1.000000e+00 : f32
    %201 = vector.broadcast %cst_58 : f32 to vector<1x128xf32>
    %202 = arith.addf %201, %200 : vector<1x128xf32>
    %203 = arith.mulf %166, %202 : vector<1x128xf32>
    %c0_59 = arith.constant 0 : index
    %c0_60 = arith.constant 0 : index
    %204 = vector.load %arg9[%c0_59, %c0_60] : memref<32x1xf32, #tpu.memory_space<vmem>>, vector<32x1xf32>
    %205 = vector.broadcast %203 : vector<1x128xf32> to vector<32x128xf32>
    %206 = arith.subf %157, %205 : vector<32x128xf32>
    %207 = vector.broadcast %204 : vector<32x1xf32> to vector<32x128xf32>
    %208 = arith.mulf %207, %206 : vector<32x128xf32>
    %209 = arith.addf %157, %208 : vector<32x128xf32>
    %c0_61 = arith.constant 0 : index
    %c0_62 = arith.constant 0 : index
    %210 = vector.load %arg10[%c0_61, %c0_62] : memref<8x32xbf16, #tpu.memory_space<vmem>>, vector<8x32xbf16>
    %211 = arith.truncf %209 : vector<32x128xf32> to vector<32x128xbf16>
    %cst_63 = arith.constant dense<0.000000e+00> : vector<8x128xf32>
    %212 = tpu.matmul %210, %211, %cst_63 {dimension_numbers = #tpu.dot_dimension_numbers<[1], [0], [0], [1], [0, 0, 1, 1], [], []>} : vector<8x32xbf16>, vector<32x128xbf16>, vector<8x128xf32> -> vector<8x128xf32>
    %c0_64 = arith.constant 0 : index
    %c0_65 = arith.constant 0 : index
    %213 = vector.load %arg11[%c0_64, %c0_65] : memref<8x1xf32, #tpu.memory_space<vmem>>, vector<8x1xf32>
    %214 = vector.broadcast %213 : vector<8x1xf32> to vector<8x128xf32>
    %215 = arith.addf %212, %214 : vector<8x128xf32>
    %c0_66 = arith.constant 0 : index
    %c0_67 = arith.constant 0 : index
    %c0_68 = arith.constant 0 : index
    %216 = vector.load %arg12[%c0_66, %c0_67, %c0_68] : memref<1x8x128xf32, #tpu.memory_space<vmem>>, vector<1x8x128xf32>
    %217 = vector.shape_cast %216 : vector<1x8x128xf32> to vector<8x128xf32>
    %218 = vector.shape_cast %215 : vector<8x128xf32> to vector<1x8x128xf32>
    tpu.vector_store %arg12[%c0_66, %c0_67, %c0_68], %218 {strides = array<i32>} : memref<1x8x128xf32, #tpu.memory_space<vmem>>, vector<1x8x128xf32>,
    return
  }
  func.func @transform_0(%arg0: i32, %arg1: i32) -> (i32, i32, i32, i32) {
    %c0_i32 = arith.constant 0 : i32
    %c0_i32_0 = arith.constant 0 : i32
    %c0_i32_1 = arith.constant 0 : i32
    return %arg0, %arg1, %c0_i32, %c0_i32_0 : i32, i32, i32, i32
  }
  func.func @transform_1(%arg0: i32, %arg1: i32) -> (i32, i32) {
    %c0_i32 = arith.constant 0 : i32
    %c0_i32_0 = arith.constant 0 : i32
    %c0_i32_1 = arith.constant 0 : i32
    return %c0_i32, %c0_i32_0 : i32, i32
  }
  func.func @transform_2(%arg0: i32, %arg1: i32) -> (i32, i32) {
    %c0_i32 = arith.constant 0 : i32
    %c0_i32_0 = arith.constant 0 : i32
    %c0_i32_1 = arith.constant 0 : i32
    return %c0_i32, %c0_i32_0 : i32, i32
  }
  func.func @transform_3(%arg0: i32, %arg1: i32) -> (i32, i32) {
    %c0_i32 = arith.constant 0 : i32
    %c0_i32_0 = arith.constant 0 : i32
    %c0_i32_1 = arith.constant 0 : i32
    return %c0_i32, %c0_i32_0 : i32, i32
  }
  func.func @transform_4(%arg0: i32, %arg1: i32) -> (i32, i32) {
    %c0_i32 = arith.constant 0 : i32
    %c0_i32_0 = arith.constant 0 : i32
    %c0_i32_1 = arith.constant 0 : i32
    return %c0_i32, %c0_i32_0 : i32, i32
  }
  func.func @transform_5(%arg0: i32, %arg1: i32) -> (i32, i32) {
    %c0_i32 = arith.constant 0 : i32
    %c0_i32_0 = arith.constant 0 : i32
    %c0_i32_1 = arith.constant 0 : i32
    return %c0_i32, %c0_i32_0 : i32, i32
  }
  func.func @transform_6(%arg0: i32, %arg1: i32) -> (i32, i32) {
    %c0_i32 = arith.constant 0 : i32
    %c0_i32_0 = arith.constant 0 : i32
    %c0_i32_1 = arith.constant 0 : i32
    return %c0_i32, %c0_i32_0 : i32, i32
  }
  func.func @transform_7(%arg0: i32, %arg1: i32) -> (i32, i32) {
    %c0_i32 = arith.constant 0 : i32
    %c0_i32_0 = arith.constant 0 : i32
    %c0_i32_1 = arith.constant 0 : i32
    return %c0_i32, %c0_i32_0 : i32, i32
  }
  func.func @transform_8(%arg0: i32, %arg1: i32) -> (i32, i32) {
    %c0_i32 = arith.constant 0 : i32
    %c0_i32_0 = arith.constant 0 : i32
    %c0_i32_1 = arith.constant 0 : i32
    return %c0_i32, %c0_i32_0 : i32, i32
  }
  func.func @transform_9(%arg0: i32, %arg1: i32) -> (i32, i32) {
    %c0_i32 = arith.constant 0 : i32
    %c0_i32_0 = arith.constant 0 : i32
    %c0_i32_1 = arith.constant 0 : i32
    return %c0_i32, %c0_i32_0 : i32, i32
  }
  func.func @transform_10(%arg0: i32, %arg1: i32) -> (i32, i32, i32) {
    %c0_i32 = arith.constant 0 : i32
    %c0_i32_0 = arith.constant 0 : i32
    return %arg0, %c0_i32, %arg1 : i32, i32, i32
  }
}

</mosaic_0001>

<llo_original>
// kernel: tpu_custom_call.1
$region0: #{tpu_custom_call.1}
  #allocation0 [shape = 'u32[]', space=smem, size = 0x4, offset = 0x4, fixed_abs, tag = 'smem constant byte address 0x4 - core index']
  #allocation1 [shape = 'u32[144,128]{1,0:T(1,128)}', space=vmem, size = 0x12000, scoped, tag = 'internal scratch']
  #allocation2 [shape = 'f32[1,1]{1,0:T(1,128)S(1)}', space=vmem, size = 0x200, scoped, tag = 'scoped memory for tpu_custom_call.1']
  %s0 = inlined_call_operand.vmem [shape: bf16[2,2,8,160], index: 0, kind: input, shape index: {}]
  %s1 = inlined_call_operand.vmem [shape: bf16[32,8], index: 1, kind: input, shape index: {}]
  %s2 = inlined_call_operand.vmem [shape: f32[32,1], index: 2, kind: input, shape index: {}]
  %s3 = inlined_call_operand.vmem [shape: f32[32,9], index: 3, kind: input, shape index: {}]
  %s4 = inlined_call_operand.vmem [shape: f32[32,1], index: 4, kind: input, shape index: {}]
  %s5 = inlined_call_operand.vmem [shape: bf16[8,32], index: 5, kind: input, shape index: {}]
  %s6 = inlined_call_operand.<no memory space> [shape: f32[1,1], index: 6, kind: input, shape index: {}]
  %s7 = inlined_call_operand.vmem [shape: f32[32,1], index: 7, kind: input, shape index: {}]
  %s8 = inlined_call_operand.vmem [shape: bf16[8,32], index: 8, kind: input, shape index: {}]
  %s9 = inlined_call_operand.vmem [shape: f32[8,1], index: 9, kind: input, shape index: {}]
  %s10 = inlined_call_operand.hbm [shape: f32[2,8,256], index: 10, kind: output, shape index: {}]
  %s11 = sld [smem:[#allocation0]]
  $region73: #{tpu_custom_call.1} parent=0
    _
  %s13 = ssub.s32 1, %s11
  %s14 = scalar_select 0, %s13, %s11
  %v15 = vstv %s6
  %16 = vst [vmem:[#allocation2] sm:$0x1] %v15
  $region1: #{tpu_custom_call.1} parent=0
    #allocation3 [shape = 'u8[8192]{0}', space=vmem, size = 0x2000, scoped, tag = 'output window, operand 0']
    #allocation4 [shape = 's32[2]{0}', space=sflag, size = 0x8, scoped, tag = 'scoped memory for tpu_custom_call.1']
    %17 = vsyncpa [#allocation4], 0
    %s18 = scalar_lea.sflag [#allocation4], 1
    %19 = vsyncpa %s18, 0
    loop: start=0, step=1, limit=6
    $region2: #{tpu_custom_call.1} parent=1 // loop_pre_header
      _
    $region3: #{tpu_custom_call.1} parent=1 // loop_header
      %s21 = sphi 0, %s25
      %p22 = scmp.ge.s32.totalorder %s21, 6
      %s28 = sphi 0, %s40
      %s29 = sphi 0, %s36
      %s30 = sphi 0, %s28
      %s31 = sphi 0, %s29
      %s32 = sphi 0, %s30
      %s33 = sphi 0, %s31
      %s45 = sphi 0, %s47
      %s48 = sphi 0, %s45
      %s49 = sphi 0, %s48
      %s65 = sphi 0, %s49
      %s69 = sphi 0, %s69
      %s71 = sphi 0, %s69
      %s72 = sphi 0, %s71
      %s86 = sphi 0, %s72
      %s90 = sphi 0, %s90
      %s92 = sphi 0, %s90
      %s93 = sphi 0, %s92
      %s107 = sphi 0, %s93
      %s111 = sphi 0, %s111
      %s113 = sphi 0, %s111
      %s114 = sphi 0, %s113
      %s128 = sphi 0, %s114
      %s132 = sphi 0, %s132
      %s134 = sphi 0, %s132
      %s135 = sphi 0, %s134
      %s149 = sphi 0, %s135
      %s153 = sphi 0, %s153
      %s155 = sphi 0, %s153
      %s156 = sphi 0, %s155
      %s170 = sphi 0, %s156
      %s174 = sphi 0, %s174
      %s176 = sphi 0, %s174
      %s177 = sphi 0, %s176
      %s191 = sphi 0, %s177
      %s195 = sphi 0, %s195
      %s197 = sphi 0, %s195
      %s198 = sphi 0, %s197
      %s212 = sphi 0, %s198
      %s216 = sphi 0, %s216
      %s218 = sphi 0, %s216
      %s219 = sphi 0, %s218
      %s233 = sphi 0, %s219
      %s237 = sphi 0, %s237
      %s239 = sphi 0, %s237
      %s240 = sphi 0, %s239
      %s254 = sphi 0, %s240
      %s262 = sphi 0, %s264
      %s265 = sphi 0, %s262
      %s266 = sphi 0, %s265
      %s282 = sphi 0, %s266
    $region4: #{tpu_custom_call.1} parent=1 // loop_header_branch
      %24 = sbr.rel (%p22) target = $region8
    $region5: #{tpu_custom_call.1} parent=1 // loop_body
      %s26 = ssub.s32 %s21, 1
      %s27 = ssub.s32 %s21, 2
      %s34 = sadd.s32 1, %s29
      %p35 = scmp.ge.s32.totalorder %s34, 2
      %s36 = scalar_select %p35, 0, %s34
      %s37 = sadd.s32 1, %s28
      %s38 = scalar_select %p35, %s37, %s28
      %p39 = scmp.ge.s32.totalorder %s38, 2
      %s40 = scalar_select %p39, 0, %s38
      %s41 = ssub.s32 %s28, %s40
      %s42 = ssub.s32 %s29, %s36
      %s43 = sor.u32 %s41, %s42
      %p44 = scmp.eq.s32.totalorder %s43, 0
      %s46 = sadd.s32 %s45, 1
      %s47 = scalar_select %p44, %s45, %s46
      %p50 = pneg %p44
      %p51 = scmp.eq.s32.totalorder %s21, 3
      %p52 = por %p50, %p51
      %p53 = scmp.ne.s32.totalorder %s45, %s48
      %p54 = scmp.eq.s32.totalorder %s21, 0
      %p55 = por %p53, %p54
      %p56 = scmp.ne.s32.totalorder %s45, %s48
      %p57 = scmp.eq.s32.totalorder %s26, 3
      %p58 = por %p56, %p57
      %p59 = scmp.ne.s32.totalorder %s48, %s49
      %p60 = scmp.eq.s32.totalorder %s26, 0
      %p61 = por %p59, %p60
      %p62 = scmp.ne.s32.totalorder %s48, %s49
      %p63 = scmp.eq.s32.totalorder %s27, 3
      %p64 = por %p62, %p63
      %p66 = scmp.ne.s32.totalorder %s49, %s65
      %p67 = scmp.eq.s32.totalorder %s27, 0
      %p68 = por %p66, %p67
      %s70 = sadd.s32 %s69, 1
      %p73 = scmp.eq.s32.totalorder %s21, 3
      %p74 = scmp.ne.s32.totalorder %s69, %s71
      %p75 = scmp.eq.s32.totalorder %s21, 0
      %p76 = por %p74, %p75
      %p77 = scmp.ne.s32.totalorder %s69, %s71
      %p78 = scmp.eq.s32.totalorder %s26, 3
      %p79 = por %p77, %p78
      %p80 = scmp.ne.s32.totalorder %s71, %s72
      %p81 = scmp.eq.s32.totalorder %s26, 0
      %p82 = por %p80, %p81
      %p83 = scmp.ne.s32.totalorder %s71, %s72
      %p84 = scmp.eq.s32.totalorder %s27, 3
      %p85 = por %p83, %p84
      %p87 = scmp.ne.s32.totalorder %s72, %s86
      %p88 = scmp.eq.s32.totalorder %s27, 0
      %p89 = por %p87, %p88
      %s91 = sadd.s32 %s90, 1
      %p94 = scmp.eq.s32.totalorder %s21, 3
      %p95 = scmp.ne.s32.totalorder %s90, %s92
      %p96 = scmp.eq.s32.totalorder %s21, 0
      %p97 = por %p95, %p96
      %p98 = scmp.ne.s32.totalorder %s90, %s92
      %p99 = scmp.eq.s32.totalorder %s26, 3
      %p100 = por %p98, %p99
      %p101 = scmp.ne.s32.totalorder %s92, %s93
      %p102 = scmp.eq.s32.totalorder %s26, 0
      %p103 = por %p101, %p102
      %p104 = scmp.ne.s32.totalorder %s92, %s93
      %p105 = scmp.eq.s32.totalorder %s27, 3
      %p106 = por %p104, %p105
      %p108 = scmp.ne.s32.totalorder %s93, %s107
      %p109 = scmp.eq.s32.totalorder %s27, 0
      %p110 = por %p108, %p109
      %s112 = sadd.s32 %s111, 1
      %p115 = scmp.eq.s32.totalorder %s21, 3
      %p116 = scmp.ne.s32.totalorder %s111, %s113
      %p117 = scmp.eq.s32.totalorder %s21, 0
      %p118 = por %p116, %p117
      %p119 = scmp.ne.s32.totalorder %s111, %s113
      %p120 = scmp.eq.s32.totalorder %s26, 3
      %p121 = por %p119, %p120
      %p122 = scmp.ne.s32.totalorder %s113, %s114
      %p123 = scmp.eq.s32.totalorder %s26, 0
      %p124 = por %p122, %p123
      %p125 = scmp.ne.s32.totalorder %s113, %s114
      %p126 = scmp.eq.s32.totalorder %s27, 3
      %p127 = por %p125, %p126
      %p129 = scmp.ne.s32.totalorder %s114, %s128
      %p130 = scmp.eq.s32.totalorder %s27, 0
      %p131 = por %p129, %p130
      %s133 = sadd.s32 %s132, 1
      %p136 = scmp.eq.s32.totalorder %s21, 3
      %p137 = scmp.ne.s32.totalorder %s132, %s134
      %p138 = scmp.eq.s32.totalorder %s21, 0
      %p139 = por %p137, %p138
      %p140 = scmp.ne.s32.totalorder %s132, %s134
      %p141 = scmp.eq.s32.totalorder %s26, 3
      %p142 = por %p140, %p141
      %p143 = scmp.ne.s32.totalorder %s134, %s135
      %p144 = scmp.eq.s32.totalorder %s26, 0
      %p145 = por %p143, %p144
      %p146 = scmp.ne.s32.totalorder %s134, %s135
      %p147 = scmp.eq.s32.totalorder %s27, 3
      %p148 = por %p146, %p147
      %p150 = scmp.ne.s32.totalorder %s135, %s149
      %p151 = scmp.eq.s32.totalorder %s27, 0
      %p152 = por %p150, %p151
      %s154 = sadd.s32 %s153, 1
      %p157 = scmp.eq.s32.totalorder %s21, 3
      %p158 = scmp.ne.s32.totalorder %s153, %s155
      %p159 = scmp.eq.s32.totalorder %s21, 0
      %p160 = por %p158, %p159
      %p161 = scmp.ne.s32.totalorder %s153, %s155
      %p162 = scmp.eq.s32.totalorder %s26, 3
      %p163 = por %p161, %p162
      %p164 = scmp.ne.s32.totalorder %s155, %s156
      %p165 = scmp.eq.s32.totalorder %s26, 0
      %p166 = por %p164, %p165
      %p167 = scmp.ne.s32.totalorder %s155, %s156
      %p168 = scmp.eq.s32.totalorder %s27, 3
      %p169 = por %p167, %p168
      %p171 = scmp.ne.s32.totalorder %s156, %s170
      %p172 = scmp.eq.s32.totalorder %s27, 0
      %p173 = por %p171, %p172
      %s175 = sadd.s32 %s174, 1
      %p178 = scmp.eq.s32.totalorder %s21, 3
      %p179 = scmp.ne.s32.totalorder %s174, %s176
      %p180 = scmp.eq.s32.totalorder %s21, 0
      %p181 = por %p179, %p180
      %p182 = scmp.ne.s32.totalorder %s174, %s176
      %p183 = scmp.eq.s32.totalorder %s26, 3
      %p184 = por %p182, %p183
      %p185 = scmp.ne.s32.totalorder %s176, %s177
      %p186 = scmp.eq.s32.totalorder %s26, 0
      %p187 = por %p185, %p186
      %p188 = scmp.ne.s32.totalorder %s176, %s177
      %p189 = scmp.eq.s32.totalorder %s27, 3
      %p190 = por %p188, %p189
      %p192 = scmp.ne.s32.totalorder %s177, %s191
      %p193 = scmp.eq.s32.totalorder %s27, 0
      %p194 = por %p192, %p193
      %s196 = sadd.s32 %s195, 1
      %p199 = scmp.eq.s32.totalorder %s21, 3
      %p200 = scmp.ne.s32.totalorder %s195, %s197
      %p201 = scmp.eq.s32.totalorder %s21, 0
      %p202 = por %p200, %p201
      %p203 = scmp.ne.s32.totalorder %s195, %s197
      %p204 = scmp.eq.s32.totalorder %s26, 3
      %p205 = por %p203, %p204
      %p206 = scmp.ne.s32.totalorder %s197, %s198
      %p207 = scmp.eq.s32.totalorder %s26, 0
      %p208 = por %p206, %p207
      %p209 = scmp.ne.s32.totalorder %s197, %s198
      %p210 = scmp.eq.s32.totalorder %s27, 3
      %p211 = por %p209, %p210
      %p213 = scmp.ne.s32.totalorder %s198, %s212
      %p214 = scmp.eq.s32.totalorder %s27, 0
      %p215 = por %p213, %p214
      %s217 = sadd.s32 %s216, 1
      %p220 = scmp.eq.s32.totalorder %s21, 3
      %p221 = scmp.ne.s32.totalorder %s216, %s218
      %p222 = scmp.eq.s32.totalorder %s21, 0
      %p223 = por %p221, %p222
      %p224 = scmp.ne.s32.totalorder %s216, %s218
      %p225 = scmp.eq.s32.totalorder %s26, 3
      %p226 = por %p224, %p225
      %p227 = scmp.ne.s32.totalorder %s218, %s219
      %p228 = scmp.eq.s32.totalorder %s26, 0
      %p229 = por %p227, %p228
      %p230 = scmp.ne.s32.totalorder %s218, %s219
      %p231 = scmp.eq.s32.totalorder %s27, 3
      %p232 = por %p230, %p231
      %p234 = scmp.ne.s32.totalorder %s219, %s233
      %p235 = scmp.eq.s32.totalorder %s27, 0
      %p236 = por %p234, %p235
      %s238 = sadd.s32 %s237, 1
      %p241 = scmp.eq.s32.totalorder %s21, 3
      %p242 = scmp.ne.s32.totalorder %s237, %s239
      %p243 = scmp.eq.s32.totalorder %s21, 0
      %p244 = por %p242, %p243
      %p245 = scmp.ne.s32.totalorder %s237, %s239
      %p246 = scmp.eq.s32.totalorder %s26, 3
      %p247 = por %p245, %p246
      %p248 = scmp.ne.s32.totalorder %s239, %s240
      %p249 = scmp.eq.s32.totalorder %s26, 0
      %p250 = por %p248, %p249
      %p251 = scmp.ne.s32.totalorder %s239, %s240
      %p252 = scmp.eq.s32.totalorder %s27, 3
      %p253 = por %p251, %p252
      %p255 = scmp.ne.s32.totalorder %s240, %s254
      %p256 = scmp.eq.s32.totalorder %s27, 0
      %p257 = por %p255, %p256
      %s258 = ssub.s32 %s28, %s40
      %s259 = ssub.s32 %s29, %s36
      %s260 = sor.u32 %s258, %s259
      %p261 = scmp.eq.s32.totalorder %s260, 0
      %s263 = sadd.s32 %s262, 1
      %s264 = scalar_select %p261, %s262, %s263
      %p267 = pneg %p261
      %p268 = scmp.eq.s32.totalorder %s21, 3
      %p269 = por %p267, %p268
      %p270 = scmp.ne.s32.totalorder %s262, %s265
      %p271 = scmp.eq.s32.totalorder %s21, 0
      %p272 = por %p270, %p271
      %p273 = scmp.ne.s32.totalorder %s262, %s265
      %p274 = scmp.eq.s32.totalorder %s26, 3
      %p275 = por %p273, %p274
      %p276 = scmp.ne.s32.totalorder %s265, %s266
      %p277 = scmp.eq.s32.totalorder %s26, 0
      %p278 = por %p276, %p277
      %p279 = scmp.ne.s32.totalorder %s265, %s266
      %p280 = scmp.eq.s32.totalorder %s27, 3
      %p281 = por %p279, %p280
      %p283 = scmp.ne.s32.totalorder %s266, %s282
      %p284 = scmp.eq.s32.totalorder %s27, 0
      %p285 = por %p283, %p284
      %p286 = scmp.le.s32.totalorder 1, %s21
      %p287 = scmp.lt.s32.totalorder %s21, 5
      %p288 = pnand %p286, %p287
      %p289 = pneg %p288
      // Predicated region
      $region9: #{tpu_custom_call.1} parent=5 // pred_check
        _
      $region10: #{tpu_custom_call.1} parent=5 // pred_check_branch
        %291 = sbr.rel (%p288) target = $region12
      $region11: #{tpu_custom_call.1} parent=5 // pred_region
        %s292 = ssub.s32 %s21, 1
        // Predicated region
        $region13: #{tpu_custom_call.1} parent=11 // pred_check
          %p293 = pneg %p82
        $region14: #{tpu_custom_call.1} parent=11 // pred_check_branch
          %295 = sbr.rel (%p293) target = $region16
        $region15: #{tpu_custom_call.1} parent=11 // pred_region
          _
        $region16: #{tpu_custom_call.1} parent=11 // pred_fallthru
          _
        // Predicated region
        $region17: #{tpu_custom_call.1} parent=11 // pred_check
          %p296 = pneg %p103
        $region18: #{tpu_custom_call.1} parent=11 // pred_check_branch
          %298 = sbr.rel (%p296) target = $region20
        $region19: #{tpu_custom_call.1} parent=11 // pred_region
          _
        $region20: #{tpu_custom_call.1} parent=11 // pred_fallthru
          _
        // Predicated region
        $region21: #{tpu_custom_call.1} parent=11 // pred_check
          %p299 = pneg %p124
        $region22: #{tpu_custom_call.1} parent=11 // pred_check_branch
          %301 = sbr.rel (%p299) target = $region24
        $region23: #{tpu_custom_call.1} parent=11 // pred_region
          _
        $region24: #{tpu_custom_call.1} parent=11 // pred_fallthru
          _
        // Predicated region
        $region25: #{tpu_custom_call.1} parent=11 // pred_check
          %p302 = pneg %p145
        $region26: #{tpu_custom_call.1} parent=11 // pred_check_branch
          %304 = sbr.rel (%p302) target = $region28
        $region27: #{tpu_custom_call.1} parent=11 // pred_region
          _
        $region28: #{tpu_custom_call.1} parent=11 // pred_fallthru
          _
        // Predicated region
        $region29: #{tpu_custom_call.1} parent=11 // pred_check
          %p305 = pneg %p166
        $region30: #{tpu_custom_call.1} parent=11 // pred_check_branch
          %307 = sbr.rel (%p305) target = $region32
        $region31: #{tpu_custom_call.1} parent=11 // pred_region
          _
        $region32: #{tpu_custom_call.1} parent=11 // pred_fallthru
          _
        // Predicated region
        $region33: #{tpu_custom_call.1} parent=11 // pred_check
          %p308 = pneg %p187
        $region34: #{tpu_custom_call.1} parent=11 // pred_check_branch
          %310 = sbr.rel (%p308) target = $region36
        $region35: #{tpu_custom_call.1} parent=11 // pred_region
          _
        $region36: #{tpu_custom_call.1} parent=11 // pred_fallthru
          _
        // Predicated region
        $region37: #{tpu_custom_call.1} parent=11 // pred_check
          %p311 = pneg %p208
        $region38: #{tpu_custom_call.1} parent=11 // pred_check_branch
          %313 = sbr.rel (%p311) target = $region40
        $region39: #{tpu_custom_call.1} parent=11 // pred_region
          _
        $region40: #{tpu_custom_call.1} parent=11 // pred_fallthru
          _
        // Predicated region
        $region41: #{tpu_custom_call.1} parent=11 // pred_check
          %p314 = pneg %p229
        $region42: #{tpu_custom_call.1} parent=11 // pred_check_branch
          %316 = sbr.rel (%p314) target = $region44
        $region43: #{tpu_custom_call.1} parent=11 // pred_region
          _
        $region44: #{tpu_custom_call.1} parent=11 // pred_fallthru
          _
        // Predicated region
        $region45: #{tpu_custom_call.1} parent=11 // pred_check
          %p317 = pneg %p250
        $region46: #{tpu_custom_call.1} parent=11 // pred_check_branch
          %319 = sbr.rel (%p317) target = $region48
        $region47: #{tpu_custom_call.1} parent=11 // pred_region
          _
        $region48: #{tpu_custom_call.1} parent=11 // pred_fallthru
          _
      $region12: #{tpu_custom_call.1} parent=5 // pred_fallthru
        _
      %p320 = scmp.lt.s32.totalorder %s21, 4
      // Predicated region
      $region49: #{tpu_custom_call.1} parent=5 // pred_check
        %p321 = pneg %p320
      $region50: #{tpu_custom_call.1} parent=5 // pred_check_branch
        %323 = sbr.rel (%p321) target = $region52
      $region51: #{tpu_custom_call.1} parent=5 // pred_region
        // Predicated region
        $region53: #{tpu_custom_call.1} parent=51 // pred_check
          %p324 = pneg %p55
        $region54: #{tpu_custom_call.1} parent=51 // pred_check_branch
          %326 = sbr.rel (%p324) target = $region56
        $region55: #{tpu_custom_call.1} parent=51 // pred_region
          %p327 = scmp.lt.s32.totalorder %s28, 1
          %s328 = scalar_select %p327, %s28, 1
          %p329 = scmp.lt.s32.totalorder %s29, 1
          %s330 = scalar_select %p329, %s29, 1
          %s331 = smul.addr %s330, 2
          %s332 = smul.addr %s328, 4
          %s333 = sadd.s32 %s331, %s332
          %s334 = smul.addr %s333, 4
          %s335 = scalar_lea.vmem %s0, %s334
        $region56: #{tpu_custom_call.1} parent=51 // pred_fallthru
          _
      $region52: #{tpu_custom_call.1} parent=5 // pred_fallthru
        _
      %p336 = scmp.le.s32.totalorder 1, %s21
      %p337 = scmp.lt.s32.totalorder %s21, 5
      %p338 = pnand %p336, %p337
      %p339 = pneg %p338
      // Predicated region
      $region57: #{tpu_custom_call.1} parent=5 // pred_check
        _
      $region58: #{tpu_custom_call.1} parent=5 // pred_check_branch
        %341 = sbr.rel (%p338) target = $region60
      $region59: #{tpu_custom_call.1} parent=5 // pred_region
        %s342 = ssub.s32 %s21, 1
        %p343 = scmp.lt.s32.totalorder %s30, 1
        %s344 = scalar_select %p343, %s30, 1
        %p345 = scmp.lt.s32.totalorder %s31, 1
        %s346 = scalar_select %p345, %s31, 1
        %s347 = smul.addr %s346, 2
        %s348 = smul.addr %s344, 4
        %s349 = sadd.s32 %s347, %s348
        %s350 = smul.addr %s349, 4
        %s351 = scalar_lea.vmem %s0, %s350
        %p352 = pneg %p61
        %p353 = pneg %p58
        %p354 = pneg %p82
        %p355 = pneg %p79
        %p356 = pneg %p103
        %p357 = pneg %p100
        %p358 = pneg %p124
        %p359 = pneg %p121
        %p360 = pneg %p145
        %p361 = pneg %p142
        %p362 = pneg %p166
        %p363 = pneg %p163
        %p364 = pneg %p187
        %p365 = pneg %p184
        %p366 = pneg %p208
        %p367 = pneg %p205
        %p368 = pneg %p229
        %p369 = pneg %p226
        %p370 = pneg %p250
        %p371 = pneg %p247
        %p372 = pneg %p278
        %p373 = pneg %p275
        %s374 = sand.u32 %s265, 1
        %s375 = scalar_lea.sflag [#allocation4], %s374
        %s376 = sand.u32 %s265, 1
        %s377 = smul.addr %s376, 8
        %s378 = scalar_lea.vmem [#allocation3], %s377
        %p379 = scmp.lt.s32.totalorder %s30, 1
        %s380 = scalar_select %p379, %s30, 1
        %p381 = scmp.lt.s32.totalorder %s31, 1
        %s382 = scalar_select %p381, %s31, 1
        %s383 = smul.addr %s382, 2
        %s384 = smul.addr %s380, 4
        %s385 = sadd.s32 %s383, %s384
        %s386 = smul.addr %s385, 4
        %s387 = scalar_lea.vmem %s0, %s386
        %v389 = vld [vmem:[%s1] sm:$0xf]
        %v390 = vld [vmem:[%s1 + $0x4] sm:$0xf]
        %v391 = vld [vmem:[%s1 + $0x8] sm:$0xf]
        %v392 = vld [vmem:[%s1 + $0xc] sm:$0xf]
        %v393 = vld [vmem:[%s387] sm:$0xff]
        %v394 = vld [vmem:[%s2] sm:$0xff]
        %v395 = vld [vmem:[%s2 + $0x8] sm:$0xff]
        %v396 = vld [vmem:[%s2 + $0x10] sm:$0xff]
        %v397 = vld [vmem:[%s2 + $0x18] sm:$0xff]
        %399 = vset.pattern.permute.xlu0 0
        %400 = vperm.xlu0 %399, %v394
        %v401 = vpop.permute.xlu0 %400
        %404 = vset.pattern.permute.xlu0 0
        %405 = vperm.xlu0 %404, %v395
        %v406 = vpop.permute.xlu0 %405
        %409 = vset.pattern.permute.xlu0 0
        %410 = vperm.xlu0 %409, %v396
        %v411 = vpop.permute.xlu0 %410
        %414 = vset.pattern.permute.xlu0 0
        %415 = vperm.xlu0 %414, %v397
        %v416 = vpop.permute.xlu0 %415
        %v422 = vunpack.c.l.b16 %v389
        %v423 = vunpack.c.l.b16 %v390
        %v424 = vunpack.c.l.b16 %v391
        %v425 = vunpack.c.l.b16 %v392
        %v426 = vpack.c.b16 %v423, %v422
        %v427 = vpack.c.b16 %v425, %v424
        %v429 = vunpack.c.l.b16 %v393
        %v430 = vunpack.c.h.b16 %v393
        %v431 = vpack.c.b16 %v429, %v429
        %v432 = vpack.c.b16 %v430, %v430
        %vm433 = vcmask 64512
        %v435 = vsel %vm433, %v426, 0
        %v438 = vsel %vm433, %v427, 0
        %vm440 = vcmask 1043456
        %v442 = vsel %vm440, %v431, 0
        %v445 = vsel %vm440, %v432, 0
        %447 = vmatprep.subr.bf16.mxu0 %v445
        %448 = vmatpush1.bf16.msra.mxu0 %v442
        %449 = vmatprep.subr.bf16.mxu0 0
        %450 = vmatpush1.bf16.msra.mxu0 0
        %451 = vmatprep.subr.bf16.mxu0 0
        %452 = vmatpush1.bf16.msra.mxu0 0
        %453 = vmatprep.subr.bf16.mxu0 0
        %454 = vmatpush1.bf16.msra.mxu0 0
        %455 = vmatprep.subr.bf16.mxu0 0
        %456 = vmatpush1.bf16.msra.mxu0 0
        %457 = vmatprep.subr.bf16.mxu0 0
        %458 = vmatpush1.bf16.msra.mxu0 0
        %459 = vmatprep.subr.bf16.mxu0 0
        %460 = vmatpush1.bf16.msra.mxu0 0
        %461 = vmatprep.subr.bf16.mxu0 0
        %462 = vmatpush1.bf16.msra.mxu0 0
        %463 = vmatprep.subr.bf16.mxu0 0
        %464 = vmatpush1.bf16.msra.mxu0 0
        %465 = vmatprep.subr.bf16.mxu0 0
        %466 = vmatpush1.bf16.msra.mxu0 0
        %467 = vmatprep.subr.bf16.mxu0 0
        %468 = vmatpush1.bf16.msra.mxu0 0
        %469 = vmatprep.subr.bf16.mxu0 0
        %470 = vmatpush1.bf16.msra.mxu0 0
        %471 = vmatprep.subr.bf16.mxu0 0
        %472 = vmatpush1.bf16.msra.mxu0 0
        %473 = vmatprep.subr.bf16.mxu0 0
        %474 = vmatpush1.bf16.msra.mxu0 0
        %475 = vmatprep.subr.bf16.mxu0 0
        %476 = vmatpush1.bf16.msra.mxu0 0
        %477 = vmatprep.subr.bf16.mxu0 0
        %478 = vmatpush1.bf16.msra.mxu0 0
        %479 = vmatprep.mubr.bf16.mxu0 0
        %480 = vmatmul.mubr.bf16.gmra.mrb[0].mxu0 %v435
        %v481 = vpop.f32.mrb[0].mxu0
        %v482 = vadd.f32 %v401, %v481
        %v483 = vpop.f32.mrb[0].mxu0
        %v484 = vadd.f32 %v401, %v483
        %v485 = vpop.f32.mrb[0].mxu0
        %v486 = vadd.f32 %v406, %v485
        %v487 = vpop.f32.mrb[0].mxu0
        %v488 = vadd.f32 %v406, %v487
        %489 = vmatprep.mubr.bf16.mxu0 0
        %490 = vmatmul.mubr.bf16.gmra.mrb[0].mxu0 %v438
        %v491 = vpop.f32.mrb[0].mxu0
        %v492 = vadd.f32 %v411, %v491
        %v493 = vpop.f32.mrb[0].mxu0
        %v494 = vadd.f32 %v411, %v493
        %v495 = vpop.f32.mrb[0].mxu0
        %v496 = vadd.f32 %v416, %v495
        %v497 = vpop.f32.mrb[0].mxu0
        %v498 = vadd.f32 %v416, %v497
        %499 = vdwg.mxu0
        %v500 = vlaneseq
        %v501 = vand.u32 %v500, 127
        %v502 = vadd.s32 %v501, 128
        %vm503 = vcmp.ge.s32.totalorder %v501, 16
        %vm504 = vcmp.ge.s32.totalorder %v502, 16
        %p505 = scmp.gt.s32.totalorder %s31, 0
        %s506 = scalar_select %p505, 1, 0
        %v507 = vstv %s506
        %vm508 = vcmp.eq.s32.totalorder %v507, 1
        %vm509 = vmor %vm503, %vm508
        %vm510 = vmor %vm504, %vm508
        %vm511 = vcmp.lt.s32.totalorder %v501, 144
        %vm512 = vcmp.lt.s32.totalorder %v502, 144
        %p513 = scmp.lt.s32.totalorder %s31, 1
        %s514 = scalar_select %p513, 1, 0
        %v515 = vstv %s514
        %vm516 = vcmp.eq.s32.totalorder %v515, 1
        %vm517 = vmor %vm511, %vm516
        %vm518 = vmor %vm512, %vm516
        %vm519 = vmand %vm509, %vm517
        %vm520 = vmand %vm510, %vm518
        %v521 = vsel %vm519, 1, 0
        %v522 = vsel %vm520, 1, 0
        %vm523 = vcmp.eq.s32.totalorder %v521, 1
        %vm524 = vcmp.eq.s32.totalorder %v522, 1
        %v525 = vsel %vm523, %v482, 0.0
        %v526 = vsel %vm524, %v484, 0.0
        %v527 = vsel %vm523, %v486, 0.0
        %v528 = vsel %vm524, %v488, 0.0
        %v529 = vsel %vm523, %v492, 0.0
        %v530 = vsel %vm524, %v494, 0.0
        %v531 = vsel %vm523, %v496, 0.0
        %v532 = vsel %vm524, %v498, 0.0
        %541 = vrot.lane.b32.xlu0 %v525, 1
        %v542 = vpop.permute.xlu0 %541
        %543 = vrot.lane.b32.xlu0 %v526, 1
        %v544 = vpop.permute.xlu0 %543
        %545 = vrot.lane.b32.xlu0 %v527, 1
        %v546 = vpop.permute.xlu0 %545
        %547 = vrot.lane.b32.xlu0 %v528, 1
        %v548 = vpop.permute.xlu0 %547
        %549 = vrot.lane.b32.xlu0 %v529, 1
        %v550 = vpop.permute.xlu0 %549
        %551 = vrot.lane.b32.xlu0 %v530, 1
        %v552 = vpop.permute.xlu0 %551
        %553 = vrot.lane.b32.xlu0 %v531, 1
        %v554 = vpop.permute.xlu0 %553
        %555 = vrot.lane.b32.xlu0 %v532, 1
        %v556 = vpop.permute.xlu0 %555
        %vm557 = vcmask 7168
        %v558 = vsel %vm557, %v542, %v544
        %v559 = vsel %vm557, %v546, %v548
        %v560 = vsel %vm557, %v550, %v552
        %v561 = vsel %vm557, %v554, %v556
        %v570 = vsel %vm557, 0.0, %v542
        %v571 = vsel %vm557, 0.0, %v546
        %v572 = vsel %vm557, 0.0, %v550
        %v573 = vsel %vm557, 0.0, %v554
        %vm574 = vcmask 269312
        %v575 = vsel %vm574, %v558, 0.0
        %v576 = vsel %vm574, %v559, 0.0
        %v577 = vsel %vm574, %v560, 0.0
        %v578 = vsel %vm574, %v561, 0.0
        %vm579 = vcmp.lt.s32.totalorder %v501, 0
        %v580 = vsub.s32 0, %v501
        %v581 = vsel %vm579, %v580, %v501
        %v582 = vshrl.u32 %v581, 4
        %v583 = vand.u32 %v581, 15
        %v584 = vsub.s32 0, %v583
        %v585 = vsel %vm579, %v584, %v583
        %vm586 = vcmp.ne.s32.totalorder %v585, 0
        %vm587 = vcmp.lt.s32.totalorder %v585, 0
        %vm588 = vmand %vm587, %vm586
        %v589 = vadd.s32 %v585, 16
        %v590 = vsel %vm588, %v589, %v585
        %vm591 = vcmp.ne.s32.totalorder %v590, 0
        %vm592 = vcmp.ne.s32.totalorder %v590, 15
        %v593 = vld [vmem:[%s3] sm:$0xff]
        %v594 = vld [vmem:[%s3 + $0x8] sm:$0xff]
        %v595 = vld [vmem:[%s3 + $0x10] sm:$0xff]
        %v596 = vld [vmem:[%s3 + $0x18] sm:$0xff]
        %v597 = vld [vmem:[%s4] sm:$0xff]
        %v598 = vld [vmem:[%s4 + $0x8] sm:$0xff]
        %v599 = vld [vmem:[%s4 + $0x10] sm:$0xff]
        %v600 = vld [vmem:[%s4 + $0x18] sm:$0xff]
        %602 = vset.pattern.permute.xlu0 0
        %603 = vperm.xlu0 %602, %v597
        %v604 = vpop.permute.xlu0 %603
        %607 = vset.pattern.permute.xlu0 0
        %608 = vperm.xlu0 %607, %v598
        %v609 = vpop.permute.xlu0 %608
        %612 = vset.pattern.permute.xlu0 0
        %613 = vperm.xlu0 %612, %v599
        %v614 = vpop.permute.xlu0 %613
        %617 = vset.pattern.permute.xlu0 0
        %618 = vperm.xlu0 %617, %v600
        %v619 = vpop.permute.xlu0 %618
        %v621 = vsel %vm591, 1, 0
        %vm622 = vcmp.eq.s32.totalorder %v621, 1
        %v623 = vsel %vm622, %v570, 0.0
        %v624 = vsel %vm622, %v571, 0.0
        %v625 = vsel %vm622, %v572, 0.0
        %v626 = vsel %vm622, %v573, 0.0
        %628 = vset.pattern.permute.xlu0 0
        %629 = vperm.xlu0 %628, %v593
        %v630 = vpop.permute.xlu0 %629
        %633 = vset.pattern.permute.xlu0 0
        %634 = vperm.xlu0 %633, %v594
        %v635 = vpop.permute.xlu0 %634
        %638 = vset.pattern.permute.xlu0 0
        %639 = vperm.xlu0 %638, %v595
        %v640 = vpop.permute.xlu0 %639
        %643 = vset.pattern.permute.xlu0 0
        %644 = vperm.xlu0 %643, %v596
        %v645 = vpop.permute.xlu0 %644
        %v647 = vmul.f32 %v623, %v630
        %v648 = vmul.f32 %v624, %v635
        %v649 = vmul.f32 %v625, %v640
        %v650 = vmul.f32 %v626, %v645
        %v651 = vadd.f32 %v604, %v647
        %v652 = vadd.f32 %v609, %v648
        %v653 = vadd.f32 %v614, %v649
        %v654 = vadd.f32 %v619, %v650
        %655 = vset.pattern.permute.xlu0 1
        %656 = vperm.xlu0 %655, %v593
        %v657 = vpop.permute.xlu0 %656
        %659 = vset.pattern.permute.xlu0 1
        %660 = vperm.xlu0 %659, %v594
        %v661 = vpop.permute.xlu0 %660
        %663 = vset.pattern.permute.xlu0 1
        %664 = vperm.xlu0 %663, %v595
        %v665 = vpop.permute.xlu0 %664
        %667 = vset.pattern.permute.xlu0 1
        %668 = vperm.xlu0 %667, %v596
        %v669 = vpop.permute.xlu0 %668
        %v671 = vmul.f32 %v570, %v657
        %v672 = vmul.f32 %v575, %v657
        %v673 = vmul.f32 %v571, %v661
        %v674 = vmul.f32 %v576, %v661
        %v675 = vmul.f32 %v572, %v665
        %v676 = vmul.f32 %v577, %v665
        %v677 = vmul.f32 %v573, %v669
        %v678 = vmul.f32 %v578, %v669
        %687 = vrot.lane.b32.xlu0 %v671, 127
        %v688 = vpop.permute.xlu0 %687
        %689 = vrot.lane.b32.xlu0 %v672, 127
        %v690 = vpop.permute.xlu0 %689
        %691 = vrot.lane.b32.xlu0 %v673, 127
        %v692 = vpop.permute.xlu0 %691
        %693 = vrot.lane.b32.xlu0 %v674, 127
        %v694 = vpop.permute.xlu0 %693
        %695 = vrot.lane.b32.xlu0 %v675, 127
        %v696 = vpop.permute.xlu0 %695
        %697 = vrot.lane.b32.xlu0 %v676, 127
        %v698 = vpop.permute.xlu0 %697
        %699 = vrot.lane.b32.xlu0 %v677, 127
        %v700 = vpop.permute.xlu0 %699
        %701 = vrot.lane.b32.xlu0 %v678, 127
        %v702 = vpop.permute.xlu0 %701
        %vm703 = vcmask 1039360
        %v704 = vsel %vm703, %v688, %v690
        %v705 = vsel %vm703, %v692, %v694
        %v706 = vsel %vm703, %v696, %v698
        %v707 = vsel %vm703, %v700, %v702
        %v712 = vadd.f32 %v651, %v704
        %v713 = vadd.f32 %v652, %v705
        %v714 = vadd.f32 %v653, %v706
        %v715 = vadd.f32 %v654, %v707
        %v716 = vsel %vm592, 1, 0
        %vm717 = vcmp.eq.s32.totalorder %v716, 1
        %726 = vrot.lane.b32.xlu0 %v570, 126
        %v727 = vpop.permute.xlu0 %726
        %728 = vrot.lane.b32.xlu0 %v575, 126
        %v729 = vpop.permute.xlu0 %728
        %730 = vrot.lane.b32.xlu0 %v571, 126
        %v731 = vpop.permute.xlu0 %730
        %732 = vrot.lane.b32.xlu0 %v576, 126
        %v733 = vpop.permute.xlu0 %732
        %734 = vrot.lane.b32.xlu0 %v572, 126
        %v735 = vpop.permute.xlu0 %734
        %736 = vrot.lane.b32.xlu0 %v577, 126
        %v737 = vpop.permute.xlu0 %736
        %738 = vrot.lane.b32.xlu0 %v573, 126
        %v739 = vpop.permute.xlu0 %738
        %740 = vrot.lane.b32.xlu0 %v578, 126
        %v741 = vpop.permute.xlu0 %740
        %vm742 = vcmask 1031168
        %v743 = vsel %vm742, %v727, %v729
        %v744 = vsel %vm742, %v731, %v733
        %v745 = vsel %vm742, %v735, %v737
        %v746 = vsel %vm742, %v739, %v741
        %v751 = vsel %vm717, %v743, 0.0
        %v752 = vsel %vm717, %v744, 0.0
        %v753 = vsel %vm717, %v745, 0.0
        %v754 = vsel %vm717, %v746, 0.0
        %755 = vset.pattern.permute.xlu0 2
        %756 = vperm.xlu0 %755, %v593
        %v757 = vpop.permute.xlu0 %756
        %759 = vset.pattern.permute.xlu0 2
        %760 = vperm.xlu0 %759, %v594
        %v761 = vpop.permute.xlu0 %760
        %763 = vset.pattern.permute.xlu0 2
        %764 = vperm.xlu0 %763, %v595
        %v765 = vpop.permute.xlu0 %764
        %767 = vset.pattern.permute.xlu0 2
        %768 = vperm.xlu0 %767, %v596
        %v769 = vpop.permute.xlu0 %768
        %v771 = vmul.f32 %v751, %v757
        %v772 = vmul.f32 %v752, %v761
        %v773 = vmul.f32 %v753, %v765
        %v774 = vmul.f32 %v754, %v769
        %v775 = vadd.f32 %v712, %v771
        %v776 = vadd.f32 %v713, %v772
        %v777 = vadd.f32 %v714, %v773
        %v778 = vadd.f32 %v715, %v774
        %779 = vrot.lane.b32.xlu0 %v570, 112
        %v780 = vpop.permute.xlu0 %779
        %781 = vrot.lane.b32.xlu0 %v575, 112
        %v782 = vpop.permute.xlu0 %781
        %783 = vrot.lane.b32.xlu0 %v571, 112
        %v784 = vpop.permute.xlu0 %783
        %785 = vrot.lane.b32.xlu0 %v576, 112
        %v786 = vpop.permute.xlu0 %785
        %787 = vrot.lane.b32.xlu0 %v572, 112
        %v788 = vpop.permute.xlu0 %787
        %789 = vrot.lane.b32.xlu0 %v577, 112
        %v790 = vpop.permute.xlu0 %789
        %791 = vrot.lane.b32.xlu0 %v573, 112
        %v792 = vpop.permute.xlu0 %791
        %793 = vrot.lane.b32.xlu0 %v578, 112
        %v794 = vpop.permute.xlu0 %793
        %vm795 = vcmask 916480
        %v796 = vsel %vm795, %v780, %v782
        %v797 = vsel %vm795, %v784, %v786
        %v798 = vsel %vm795, %v788, %v790
        %v799 = vsel %vm795, %v792, %v794
        %v804 = vsel %vm622, %v796, 0.0
        %v805 = vsel %vm622, %v797, 0.0
        %v806 = vsel %vm622, %v798, 0.0
        %v807 = vsel %vm622, %v799, 0.0
        %808 = vset.pattern.permute.xlu0 3
        %809 = vperm.xlu0 %808, %v593
        %v810 = vpop.permute.xlu0 %809
        %812 = vset.pattern.permute.xlu0 3
        %813 = vperm.xlu0 %812, %v594
        %v814 = vpop.permute.xlu0 %813
        %816 = vset.pattern.permute.xlu0 3
        %817 = vperm.xlu0 %816, %v595
        %v818 = vpop.permute.xlu0 %817
        %820 = vset.pattern.permute.xlu0 3
        %821 = vperm.xlu0 %820, %v596
        %v822 = vpop.permute.xlu0 %821
        %v824 = vmul.f32 %v804, %v810
        %v825 = vmul.f32 %v805, %v814
        %v826 = vmul.f32 %v806, %v818
        %v827 = vmul.f32 %v807, %v822
        %v828 = vadd.f32 %v775, %v824
        %v829 = vadd.f32 %v776, %v825
        %v830 = vadd.f32 %v777, %v826
        %v831 = vadd.f32 %v778, %v827
        %832 = vset.pattern.permute.xlu0 4
        %833 = vperm.xlu0 %832, %v593
        %v834 = vpop.permute.xlu0 %833
        %836 = vset.pattern.permute.xlu0 4
        %837 = vperm.xlu0 %836, %v594
        %v838 = vpop.permute.xlu0 %837
        %840 = vset.pattern.permute.xlu0 4
        %841 = vperm.xlu0 %840, %v595
        %v842 = vpop.permute.xlu0 %841
        %844 = vset.pattern.permute.xlu0 4
        %845 = vperm.xlu0 %844, %v596
        %v846 = vpop.permute.xlu0 %845
        %v848 = vmul.f32 %v570, %v834
        %v849 = vmul.f32 %v575, %v834
        %v850 = vmul.f32 %v571, %v838
        %v851 = vmul.f32 %v576, %v838
        %v852 = vmul.f32 %v572, %v842
        %v853 = vmul.f32 %v577, %v842
        %v854 = vmul.f32 %v573, %v846
        %v855 = vmul.f32 %v578, %v846
        %864 = vrot.lane.b32.xlu0 %v848, 111
        %v865 = vpop.permute.xlu0 %864
        %866 = vrot.lane.b32.xlu0 %v849, 111
        %v867 = vpop.permute.xlu0 %866
        %868 = vrot.lane.b32.xlu0 %v850, 111
        %v869 = vpop.permute.xlu0 %868
        %870 = vrot.lane.b32.xlu0 %v851, 111
        %v871 = vpop.permute.xlu0 %870
        %872 = vrot.lane.b32.xlu0 %v852, 111
        %v873 = vpop.permute.xlu0 %872
        %874 = vrot.lane.b32.xlu0 %v853, 111
        %v875 = vpop.permute.xlu0 %874
        %876 = vrot.lane.b32.xlu0 %v854, 111
        %v877 = vpop.permute.xlu0 %876
        %878 = vrot.lane.b32.xlu0 %v855, 111
        %v879 = vpop.permute.xlu0 %878
        %vm880 = vcmask 908288
        %v881 = vsel %vm880, %v865, %v867
        %v882 = vsel %vm880, %v869, %v871
        %v883 = vsel %vm880, %v873, %v875
        %v884 = vsel %vm880, %v877, %v879
        %v889 = vadd.f32 %v828, %v881
        %v890 = vadd.f32 %v829, %v882
        %v891 = vadd.f32 %v830, %v883
        %v892 = vadd.f32 %v831, %v884
        %893 = vrot.lane.b32.xlu0 %v570, 110
        %v894 = vpop.permute.xlu0 %893
        %895 = vrot.lane.b32.xlu0 %v575, 110
        %v896 = vpop.permute.xlu0 %895
        %897 = vrot.lane.b32.xlu0 %v571, 110
        %v898 = vpop.permute.xlu0 %897
        %899 = vrot.lane.b32.xlu0 %v576, 110
        %v900 = vpop.permute.xlu0 %899
        %901 = vrot.lane.b32.xlu0 %v572, 110
        %v902 = vpop.permute.xlu0 %901
        %903 = vrot.lane.b32.xlu0 %v577, 110
        %v904 = vpop.permute.xlu0 %903
        %905 = vrot.lane.b32.xlu0 %v573, 110
        %v906 = vpop.permute.xlu0 %905
        %907 = vrot.lane.b32.xlu0 %v578, 110
        %v908 = vpop.permute.xlu0 %907
        %vm909 = vcmask 900096
        %v910 = vsel %vm909, %v894, %v896
        %v911 = vsel %vm909, %v898, %v900
        %v912 = vsel %vm909, %v902, %v904
        %v913 = vsel %vm909, %v906, %v908
        %v918 = vsel %vm717, %v910, 0.0
        %v919 = vsel %vm717, %v911, 0.0
        %v920 = vsel %vm717, %v912, 0.0
        %v921 = vsel %vm717, %v913, 0.0
        %922 = vset.pattern.permute.xlu0 5
        %923 = vperm.xlu0 %922, %v593
        %v924 = vpop.permute.xlu0 %923
        %926 = vset.pattern.permute.xlu0 5
        %927 = vperm.xlu0 %926, %v594
        %v928 = vpop.permute.xlu0 %927
        %930 = vset.pattern.permute.xlu0 5
        %931 = vperm.xlu0 %930, %v595
        %v932 = vpop.permute.xlu0 %931
        %934 = vset.pattern.permute.xlu0 5
        %935 = vperm.xlu0 %934, %v596
        %v936 = vpop.permute.xlu0 %935
        %v938 = vmul.f32 %v918, %v924
        %v939 = vmul.f32 %v919, %v928
        %v940 = vmul.f32 %v920, %v932
        %v941 = vmul.f32 %v921, %v936
        %v942 = vadd.f32 %v889, %v938
        %v943 = vadd.f32 %v890, %v939
        %v944 = vadd.f32 %v891, %v940
        %v945 = vadd.f32 %v892, %v941
        %946 = vrot.lane.b32.xlu0 %v570, 96
        %v947 = vpop.permute.xlu0 %946
        %948 = vrot.lane.b32.xlu0 %v575, 96
        %v949 = vpop.permute.xlu0 %948
        %950 = vrot.lane.b32.xlu0 %v571, 96
        %v951 = vpop.permute.xlu0 %950
        %952 = vrot.lane.b32.xlu0 %v576, 96
        %v953 = vpop.permute.xlu0 %952
        %954 = vrot.lane.b32.xlu0 %v572, 96
        %v955 = vpop.permute.xlu0 %954
        %956 = vrot.lane.b32.xlu0 %v577, 96
        %v957 = vpop.permute.xlu0 %956
        %958 = vrot.lane.b32.xlu0 %v573, 96
        %v959 = vpop.permute.xlu0 %958
        %960 = vrot.lane.b32.xlu0 %v578, 96
        %v961 = vpop.permute.xlu0 %960
        %vm962 = vcmask 785408
        %v963 = vsel %vm962, %v947, %v949
        %v964 = vsel %vm962, %v951, %v953
        %v965 = vsel %vm962, %v955, %v957
        %v966 = vsel %vm962, %v959, %v961
        %v971 = vsel %vm622, %v963, 0.0
        %v972 = vsel %vm622, %v964, 0.0
        %v973 = vsel %vm622, %v965, 0.0
        %v974 = vsel %vm622, %v966, 0.0
        %975 = vset.pattern.permute.xlu0 6
        %976 = vperm.xlu0 %975, %v593
        %v977 = vpop.permute.xlu0 %976
        %979 = vset.pattern.permute.xlu0 6
        %980 = vperm.xlu0 %979, %v594
        %v981 = vpop.permute.xlu0 %980
        %983 = vset.pattern.permute.xlu0 6
        %984 = vperm.xlu0 %983, %v595
        %v985 = vpop.permute.xlu0 %984
        %987 = vset.pattern.permute.xlu0 6
        %988 = vperm.xlu0 %987, %v596
        %v989 = vpop.permute.xlu0 %988
        %v991 = vmul.f32 %v971, %v977
        %v992 = vmul.f32 %v972, %v981
        %v993 = vmul.f32 %v973, %v985
        %v994 = vmul.f32 %v974, %v989
        %v995 = vadd.f32 %v942, %v991
        %v996 = vadd.f32 %v943, %v992
        %v997 = vadd.f32 %v944, %v993
        %v998 = vadd.f32 %v945, %v994
        %999 = vset.pattern.permute.xlu0 7
        %1000 = vperm.xlu0 %999, %v593
        %v1001 = vpop.permute.xlu0 %1000
        %1003 = vset.pattern.permute.xlu0 7
        %1004 = vperm.xlu0 %1003, %v594
        %v1005 = vpop.permute.xlu0 %1004
        %1007 = vset.pattern.permute.xlu0 7
        %1008 = vperm.xlu0 %1007, %v595
        %v1009 = vpop.permute.xlu0 %1008
        %1011 = vset.pattern.permute.xlu0 7
        %1012 = vperm.xlu0 %1011, %v596
        %v1013 = vpop.permute.xlu0 %1012
        %v1015 = vmul.f32 %v570, %v1001
        %v1016 = vmul.f32 %v575, %v1001
        %v1017 = vmul.f32 %v571, %v1005
        %v1018 = vmul.f32 %v576, %v1005
        %v1019 = vmul.f32 %v572, %v1009
        %v1020 = vmul.f32 %v577, %v1009
        %v1021 = vmul.f32 %v573, %v1013
        %v1022 = vmul.f32 %v578, %v1013
        %1031 = vrot.lane.b32.xlu0 %v1015, 95
        %v1032 = vpop.permute.xlu0 %1031
        %1033 = vrot.lane.b32.xlu0 %v1016, 95
        %v1034 = vpop.permute.xlu0 %1033
        %1035 = vrot.lane.b32.xlu0 %v1017, 95
        %v1036 = vpop.permute.xlu0 %1035
        %1037 = vrot.lane.b32.xlu0 %v1018, 95
        %v1038 = vpop.permute.xlu0 %1037
        %1039 = vrot.lane.b32.xlu0 %v1019, 95
        %v1040 = vpop.permute.xlu0 %1039
        %1041 = vrot.lane.b32.xlu0 %v1020, 95
        %v1042 = vpop.permute.xlu0 %1041
        %1043 = vrot.lane.b32.xlu0 %v1021, 95
        %v1044 = vpop.permute.xlu0 %1043
        %1045 = vrot.lane.b32.xlu0 %v1022, 95
        %v1046 = vpop.permute.xlu0 %1045
        %vm1047 = vcmask 777216
        %v1048 = vsel %vm1047, %v1032, %v1034
        %v1049 = vsel %vm1047, %v1036, %v1038
        %v1050 = vsel %vm1047, %v1040, %v1042
        %v1051 = vsel %vm1047, %v1044, %v1046
        %v1056 = vadd.f32 %v995, %v1048
        %v1057 = vadd.f32 %v996, %v1049
        %v1058 = vadd.f32 %v997, %v1050
        %v1059 = vadd.f32 %v998, %v1051
        %1060 = vrot.lane.b32.xlu0 %v570, 94
        %v1061 = vpop.permute.xlu0 %1060
        %1062 = vrot.lane.b32.xlu0 %v575, 94
        %v1063 = vpop.permute.xlu0 %1062
        %1064 = vrot.lane.b32.xlu0 %v571, 94
        %v1065 = vpop.permute.xlu0 %1064
        %1066 = vrot.lane.b32.xlu0 %v576, 94
        %v1067 = vpop.permute.xlu0 %1066
        %1068 = vrot.lane.b32.xlu0 %v572, 94
        %v1069 = vpop.permute.xlu0 %1068
        %1070 = vrot.lane.b32.xlu0 %v577, 94
        %v1071 = vpop.permute.xlu0 %1070
        %1072 = vrot.lane.b32.xlu0 %v573, 94
        %v1073 = vpop.permute.xlu0 %1072
        %1074 = vrot.lane.b32.xlu0 %v578, 94
        %v1075 = vpop.permute.xlu0 %1074
        %vm1076 = vcmask 769024
        %v1077 = vsel %vm1076, %v1061, %v1063
        %v1078 = vsel %vm1076, %v1065, %v1067
        %v1079 = vsel %vm1076, %v1069, %v1071
        %v1080 = vsel %vm1076, %v1073, %v1075
        %v1085 = vsel %vm717, %v1077, 0.0
        %v1086 = vsel %vm717, %v1078, 0.0
        %v1087 = vsel %vm717, %v1079, 0.0
        %v1088 = vsel %vm717, %v1080, 0.0
        %1089 = vset.pattern.permute.xlu0 8
        %1090 = vperm.xlu0 %1089, %v593
        %v1091 = vpop.permute.xlu0 %1090
        %1093 = vset.pattern.permute.xlu0 8
        %1094 = vperm.xlu0 %1093, %v594
        %v1095 = vpop.permute.xlu0 %1094
        %1097 = vset.pattern.permute.xlu0 8
        %1098 = vperm.xlu0 %1097, %v595
        %v1099 = vpop.permute.xlu0 %1098
        %1101 = vset.pattern.permute.xlu0 8
        %1102 = vperm.xlu0 %1101, %v596
        %v1103 = vpop.permute.xlu0 %1102
        %v1105 = vmul.f32 %v1085, %v1091
        %v1106 = vmul.f32 %v1086, %v1095
        %v1107 = vmul.f32 %v1087, %v1099
        %v1108 = vmul.f32 %v1088, %v1103
        %v1109 = vadd.f32 %v1056, %v1105
        %v1110 = vadd.f32 %v1057, %v1106
        %v1111 = vadd.f32 %v1058, %v1107
        %v1112 = vadd.f32 %v1059, %v1108
        %v1113 = vmul.f32 %v1109, 0.5
        %v1114 = vmul.f32 %v1110, 0.5
        %v1115 = vmul.f32 %v1111, 0.5
        %v1116 = vmul.f32 %v1112, 0.5
        %v1117 = vmul.f32 %v1109, 0.70710677
        %v1118 = vmul.f32 %v1110, 0.70710677
        %v1119 = vmul.f32 %v1111, 0.70710677
        %v1120 = vmul.f32 %v1112, 0.70710677
        %v1121 = vand.u32 2147483647, %v1117
        %v1122 = vand.u32 2147483647, %v1118
        %v1123 = vand.u32 2147483647, %v1119
        %v1124 = vand.u32 2147483647, %v1120
        %v1125 = vmul.f32 %v1121, 0.3275911
        %v1126 = vmul.f32 %v1122, 0.3275911
        %v1127 = vmul.f32 %v1123, 0.3275911
        %v1128 = vmul.f32 %v1124, 0.3275911
        %v1129 = vadd.f32 %v1125, 1.0
        %v1130 = vadd.f32 %v1126, 1.0
        %v1131 = vadd.f32 %v1127, 1.0
        %v1132 = vadd.f32 %v1128, 1.0
        %v1133 = vrcp.pop %v1129
        %v1134 = vrcp.pop %v1130
        %v1135 = vrcp.pop %v1131
        %v1136 = vrcp.pop %v1132
        %v1137 = vmul.f32 %v1133, 1.0614054
        %v1138 = vmul.f32 %v1134, 1.0614054
        %v1139 = vmul.f32 %v1135, 1.0614054
        %v1140 = vmul.f32 %v1136, 1.0614054
        %v1141 = vadd.f32 %v1137, -1.4531521
        %v1142 = vadd.f32 %v1138, -1.4531521
        %v1143 = vadd.f32 %v1139, -1.4531521
        %v1144 = vadd.f32 %v1140, -1.4531521
        %v1145 = vmul.f32 %v1141, %v1133
        %v1146 = vmul.f32 %v1142, %v1134
        %v1147 = vmul.f32 %v1143, %v1135
        %v1148 = vmul.f32 %v1144, %v1136
        %v1149 = vadd.f32 %v1145, 1.4214138
        %v1150 = vadd.f32 %v1146, 1.4214138
        %v1151 = vadd.f32 %v1147, 1.4214138
        %v1152 = vadd.f32 %v1148, 1.4214138
        %v1153 = vmul.f32 %v1149, %v1133
        %v1154 = vmul.f32 %v1150, %v1134
        %v1155 = vmul.f32 %v1151, %v1135
        %v1156 = vmul.f32 %v1152, %v1136
        %v1157 = vadd.f32 %v1153, -0.28449672
        %v1158 = vadd.f32 %v1154, -0.28449672
        %v1159 = vadd.f32 %v1155, -0.28449672
        %v1160 = vadd.f32 %v1156, -0.28449672
        %v1161 = vmul.f32 %v1157, %v1133
        %v1162 = vmul.f32 %v1158, %v1134
        %v1163 = vmul.f32 %v1159, %v1135
        %v1164 = vmul.f32 %v1160, %v1136
        %v1165 = vadd.f32 %v1161, 0.2548296
        %v1166 = vadd.f32 %v1162, 0.2548296
        %v1167 = vadd.f32 %v1163, 0.2548296
        %v1168 = vadd.f32 %v1164, 0.2548296
        %v1169 = vmul.f32 %v1165, %v1133
        %v1170 = vmul.f32 %v1166, %v1134
        %v1171 = vmul.f32 %v1167, %v1135
        %v1172 = vmul.f32 %v1168, %v1136
        %v1173 = vsub.f32 0.0, %v1121
        %v1174 = vsub.f32 0.0, %v1122
        %v1175 = vsub.f32 0.0, %v1123
        %v1176 = vsub.f32 0.0, %v1124
        %v1177 = vmul.f32 %v1173, %v1121
        %v1178 = vmul.f32 %v1174, %v1122
        %v1179 = vmul.f32 %v1175, %v1123
        %v1180 = vmul.f32 %v1176, %v1124
        %v1181 = vmul.f32 %v1177, 1.442695
        %v1182 = vpow.pop %v1181
        %v1183 = vmul.f32 %v1178, 1.442695
        %v1184 = vpow.pop %v1183
        %v1185 = vmul.f32 %v1179, 1.442695
        %v1186 = vpow.pop %v1185
        %v1187 = vmul.f32 %v1180, 1.442695
        %v1188 = vpow.pop %v1187
        %v1189 = vmul.f32 %v1169, %v1182
        %v1190 = vmul.f32 %v1170, %v1184
        %v1191 = vmul.f32 %v1171, %v1186
        %v1192 = vmul.f32 %v1172, %v1188
        %v1193 = vsub.f32 1.0, %v1189
        %v1194 = vsub.f32 1.0, %v1190
        %v1195 = vsub.f32 1.0, %v1191
        %v1196 = vsub.f32 1.0, %v1192
        %vm1197 = vcmp.ge.f32.partialorder %v1117, 0.0
        %vm1198 = vcmp.ge.f32.partialorder %v1118, 0.0
        %vm1199 = vcmp.ge.f32.partialorder %v1119, 0.0
        %vm1200 = vcmp.ge.f32.partialorder %v1120, 0.0
        %v1201 = vsub.f32 0.0, %v1193
        %v1202 = vsub.f32 0.0, %v1194
        %v1203 = vsub.f32 0.0, %v1195
        %v1204 = vsub.f32 0.0, %v1196
        %v1205 = vsel %vm1197, %v1193, %v1201
        %v1206 = vsel %vm1198, %v1194, %v1202
        %v1207 = vsel %vm1199, %v1195, %v1203
        %v1208 = vsel %vm1200, %v1196, %v1204
        %v1209 = vadd.f32 %v1205, 1.0
        %v1210 = vadd.f32 %v1206, 1.0
        %v1211 = vadd.f32 %v1207, 1.0
        %v1212 = vadd.f32 %v1208, 1.0
        %v1213 = vmul.f32 %v1113, %v1209
        %v1214 = vmul.f32 %v1114, %v1210
        %v1215 = vmul.f32 %v1115, %v1211
        %v1216 = vmul.f32 %v1116, %v1212
        %v1217 = vpack.c.bf16 %v1214, %v1213
        %v1218 = vpack.c.bf16 %v1216, %v1215
        %v1219 = vld [vmem:[%s5] sm:$0xf]
        %vm1220 = vcmask 261120
        %v1222 = vsel %vm1220, %v1219, 0
        %1224 = vmatprep.subr.bf16.mxu0 0
        %1225 = vmatpush1.bf16.msra.mxu0 %v1217
        %1226 = vmatprep.subr.bf16.mxu0 0
        %1227 = vmatpush1.bf16.msra.mxu0 %v1218
        %1228 = vmatprep.subr.bf16.mxu0 0
        %1229 = vmatpush1.bf16.msra.mxu0 0
        %1230 = vmatprep.subr.bf16.mxu0 0
        %1231 = vmatpush1.bf16.msra.mxu0 0
        %1232 = vmatprep.subr.bf16.mxu0 0
        %1233 = vmatpush1.bf16.msra.mxu0 0
        %1234 = vmatprep.subr.bf16.mxu0 0
        %1235 = vmatpush1.bf16.msra.mxu0 0
        %1236 = vmatprep.subr.bf16.mxu0 0
        %1237 = vmatpush1.bf16.msra.mxu0 0
        %1238 = vmatprep.subr.bf16.mxu0 0
        %1239 = vmatpush1.bf16.msra.mxu0 0
        %1240 = vmatprep.subr.bf16.mxu0 0
        %1241 = vmatpush1.bf16.msra.mxu0 0
        %1242 = vmatprep.subr.bf16.mxu0 0
        %1243 = vmatpush1.bf16.msra.mxu0 0
        %1244 = vmatprep.subr.bf16.mxu0 0
        %1245 = vmatpush1.bf16.msra.mxu0 0
        %1246 = vmatprep.subr.bf16.mxu0 0
        %1247 = vmatpush1.bf16.msra.mxu0 0
        %1248 = vmatprep.subr.bf16.mxu0 0
        %1249 = vmatpush1.bf16.msra.mxu0 0
        %1250 = vmatprep.subr.bf16.mxu0 0
        %1251 = vmatpush1.bf16.msra.mxu0 0
        %1252 = vmatprep.subr.bf16.mxu0 0
        %1253 = vmatpush1.bf16.msra.mxu0 0
        %1254 = vmatprep.subr.bf16.mxu0 0
        %1255 = vmatpush1.bf16.msra.mxu0 0
        %1256 = vmatprep.mubr.bf16.mxu0 0
        %1257 = vmatmul.mubr.bf16.gmra.mrb[0].mxu0 %v1222
        %v1258 = vpop.f32.mrb[0].mxu0
        %v1259 = vadd.f32 0.0, %v1258
        %v1260 = vpop.f32.mrb[0].mxu0
        %v1261 = vpop.f32.mrb[0].mxu0
        %v1262 = vpop.f32.mrb[0].mxu0
        %1263 = vdwg.mxu0
        %v1264 = vld [vmem:[#allocation2] sm:$0x1]
        %1266 = vset.pattern.permute.xlu0 0
        %1267 = vperm.xlu0 %1266, %v1264
        %v1268 = vpop.permute.xlu0 %1267
        %v1270 = vlaneseq
        %v1271 = vshrl.u32 %v1270, 7
        %v1272 = vsub.s32 0, %v1271
        %v1273 = vrot.slane %v1268, %v1272
        %v1274 = vadd.f32 %v1259, %v1273
        %v1275 = vmul.f32 %v1274, 0.5
        %v1276 = vmul.f32 %v1274, 0.70710677
        %v1277 = vand.u32 2147483647, %v1276
        %v1278 = vmul.f32 %v1277, 0.3275911
        %v1279 = vadd.f32 %v1278, 1.0
        %v1280 = vrcp.pop %v1279
        %v1281 = vmul.f32 %v1280, 1.0614054
        %v1282 = vadd.f32 %v1281, -1.4531521
        %v1283 = vmul.f32 %v1282, %v1280
        %v1284 = vadd.f32 %v1283, 1.4214138
        %v1285 = vmul.f32 %v1284, %v1280
        %v1286 = vadd.f32 %v1285, -0.28449672
        %v1287 = vmul.f32 %v1286, %v1280
        %v1288 = vadd.f32 %v1287, 0.2548296
        %v1289 = vmul.f32 %v1288, %v1280
        %v1290 = vsub.f32 0.0, %v1277
        %v1291 = vmul.f32 %v1290, %v1277
        %v1292 = vmul.f32 %v1291, 1.442695
        %v1293 = vpow.pop %v1292
        %v1294 = vmul.f32 %v1289, %v1293
        %v1295 = vsub.f32 1.0, %v1294
        %vm1296 = vcmp.ge.f32.partialorder %v1276, 0.0
        %v1297 = vsub.f32 0.0, %v1295
        %v1298 = vsel %vm1296, %v1295, %v1297
        %v1299 = vadd.f32 %v1298, 1.0
        %v1300 = vmul.f32 %v1275, %v1299
        %v1301 = vld [vmem:[%s7] sm:$0xff]
        %v1302 = vld [vmem:[%s7 + $0x8] sm:$0xff]
        %v1303 = vld [vmem:[%s7 + $0x10] sm:$0xff]
        %v1304 = vld [vmem:[%s7 + $0x18] sm:$0xff]
        %v1305 = vlaneseq
        %v1306 = vshrl.u32 %v1305, 7
        %v1307 = vsub.s32 0, %v1306
        %v1308 = vrot.slane %v1300, %v1307
        %v1309 = vsub.f32 %v1213, %v1308
        %v1310 = vsub.f32 %v1214, %v1308
        %v1311 = vsub.f32 %v1215, %v1308
        %v1312 = vsub.f32 %v1216, %v1308
        %1314 = vset.pattern.permute.xlu0 0
        %1315 = vperm.xlu0 %1314, %v1301
        %v1316 = vpop.permute.xlu0 %1315
        %1319 = vset.pattern.permute.xlu0 0
        %1320 = vperm.xlu0 %1319, %v1302
        %v1321 = vpop.permute.xlu0 %1320
        %1324 = vset.pattern.permute.xlu0 0
        %1325 = vperm.xlu0 %1324, %v1303
        %v1326 = vpop.permute.xlu0 %1325
        %1329 = vset.pattern.permute.xlu0 0
        %1330 = vperm.xlu0 %1329, %v1304
        %v1331 = vpop.permute.xlu0 %1330
        %v1333 = vmul.f32 %v1316, %v1309
        %v1334 = vmul.f32 %v1321, %v1310
        %v1335 = vmul.f32 %v1326, %v1311
        %v1336 = vmul.f32 %v1331, %v1312
        %v1337 = vadd.f32 %v1213, %v1333
        %v1338 = vadd.f32 %v1214, %v1334
        %v1339 = vadd.f32 %v1215, %v1335
        %v1340 = vadd.f32 %v1216, %v1336
        %v1341 = vld [vmem:[%s8] sm:$0xf]
        %v1342 = vpack.c.bf16 %v1338, %v1337
        %v1343 = vpack.c.bf16 %v1340, %v1339
        %v1344 = vld [vmem:[%s9] sm:$0xff]
        %1346 = vset.pattern.permute.xlu0 0
        %1347 = vperm.xlu0 %1346, %v1344
        %v1348 = vpop.permute.xlu0 %1347
        %v1351 = vsel %vm1220, %v1341, 0
        %1353 = vmatprep.subr.bf16.mxu0 0
        %1354 = vmatpush1.bf16.msra.mxu0 %v1342
        %1355 = vmatprep.subr.bf16.mxu0 0
        %1356 = vmatpush1.bf16.msra.mxu0 %v1343
        %1357 = vmatprep.subr.bf16.mxu0 0
        %1358 = vmatpush1.bf16.msra.mxu0 0
        %1359 = vmatprep.subr.bf16.mxu0 0
        %1360 = vmatpush1.bf16.msra.mxu0 0
        %1361 = vmatprep.subr.bf16.mxu0 0
        %1362 = vmatpush1.bf16.msra.mxu0 0
        %1363 = vmatprep.subr.bf16.mxu0 0
        %1364 = vmatpush1.bf16.msra.mxu0 0
        %1365 = vmatprep.subr.bf16.mxu0 0
        %1366 = vmatpush1.bf16.msra.mxu0 0
        %1367 = vmatprep.subr.bf16.mxu0 0
        %1368 = vmatpush1.bf16.msra.mxu0 0
        %1369 = vmatprep.subr.bf16.mxu0 0
        %1370 = vmatpush1.bf16.msra.mxu0 0
        %1371 = vmatprep.subr.bf16.mxu0 0
        %1372 = vmatpush1.bf16.msra.mxu0 0
        %1373 = vmatprep.subr.bf16.mxu0 0
        %1374 = vmatpush1.bf16.msra.mxu0 0
        %1375 = vmatprep.subr.bf16.mxu0 0
        %1376 = vmatpush1.bf16.msra.mxu0 0
        %1377 = vmatprep.subr.bf16.mxu0 0
        %1378 = vmatpush1.bf16.msra.mxu0 0
        %1379 = vmatprep.subr.bf16.mxu0 0
        %1380 = vmatpush1.bf16.msra.mxu0 0
        %1381 = vmatprep.subr.bf16.mxu0 0
        %1382 = vmatpush1.bf16.msra.mxu0 0
        %1383 = vmatprep.subr.bf16.mxu0 0
        %1384 = vmatpush1.bf16.msra.mxu0 0
        %1385 = vmatprep.mubr.bf16.mxu0 0
        %1386 = vmatmul.mubr.bf16.gmra.mrb[0].mxu0 %v1351
        %v1387 = vpop.f32.mrb[0].mxu0
        %v1388 = vadd.f32 %v1348, %v1387
        %v1389 = vpop.f32.mrb[0].mxu0
        %v1390 = vpop.f32.mrb[0].mxu0
        %v1391 = vpop.f32.mrb[0].mxu0
        %1392 = vdwg.mxu0
        %1393 = vst [vmem:[%s378] sm:$0xff] %v1388
        %s1394 = sand.u32 %s265, 1
        %s1395 = scalar_lea.sflag [#allocation4], %s1394
        %s1396 = sand.u32 %s265, 1
        %s1397 = smul.addr %s1396, 8
        %s1398 = scalar_lea.vmem [#allocation3], %s1397
        // Predicated region
        $region61: #{tpu_custom_call.1} parent=59 // pred_check
          %p1399 = pneg %p275
        $region62: #{tpu_custom_call.1} parent=59 // pred_check_branch
          %1401 = sbr.rel (%p1399) target = $region64
        $region63: #{tpu_custom_call.1} parent=59 // pred_region
          %s1403 = ssub.s32 128, 128
          %1404 = vsyncadd %s1395, %s1403
          %s1405 = smul.addr %s30, 2
          %s1406 = sadd.s32 %s31, %s1405
          %s1407 = smul.addr %s1406, 128
          %s1408 = scalar_lea.hbm %s10, %s1407
          %s1410 = sshll.u32 %s1398, 4
          %s1411 = int_to_ptr.vmem [resolvable:$true] %s1410
          %1413 = dma.vmem_to_hbm [thread:$0]  %s1411, 128, %s1408, %s1395
        $region64: #{tpu_custom_call.1} parent=59 // pred_fallthru
          _
      $region60: #{tpu_custom_call.1} parent=5 // pred_fallthru
        _
      %p1414 = scmp.le.s32.totalorder 2, %s21
      // Predicated region
      $region65: #{tpu_custom_call.1} parent=5 // pred_check
        %p1415 = pneg %p1414
      $region66: #{tpu_custom_call.1} parent=5 // pred_check_branch
        %1417 = sbr.rel (%p1415) target = $region68
      $region67: #{tpu_custom_call.1} parent=5 // pred_region
        %s1418 = ssub.s32 %s21, 2
        // Predicated region
        $region69: #{tpu_custom_call.1} parent=67 // pred_check
          %p1419 = pneg %p281
        $region70: #{tpu_custom_call.1} parent=67 // pred_check_branch
          %1421 = sbr.rel (%p1419) target = $region72
        $region71: #{tpu_custom_call.1} parent=67 // pred_region
          %s1422 = sand.u32 %s266, 1
          %s1423 = scalar_lea.sflag [#allocation4], %s1422
          %s1424 = sand.u32 %s266, 1
          %s1425 = smul.addr %s1424, 8
          %s1426 = scalar_lea.vmem [#allocation3], %s1425
          %1427 = dma.done %s1423, 128
        $region72: #{tpu_custom_call.1} parent=67 // pred_fallthru
          _
      $region68: #{tpu_custom_call.1} parent=5 // pred_fallthru
        _
    $region6: #{tpu_custom_call.1} parent=1 // loop_footer
      %s25 = sadd.s32 1, %s21
    $region7: #{tpu_custom_call.1} parent=1 // loop_footer_branch
      %20 = sbr.rel target = $region3
    $region8: #{tpu_custom_call.1} parent=1 // loop_exit
      _
    %1428 = vsyncpa [#allocation4], 1
    %s1429 = scalar_lea.sflag [#allocation4], 1
    %1430 = vsyncpa %s1429, 1

</llo_original>
